<compile_context>
chip_gen: v7x
topology: tpu7x:2x2x1
jax: 0.10.0
libtpu: 0.0.40
codegen_flags: <defaults>
</compile_context>

<pallas_src>
import jax
import jax.numpy as jnp
import numpy as np
from jax import lax
from jax.experimental import pallas as pl
from jax.experimental.pallas import tpu as pltpu


def _poly_up_kernel(ci_ref, cj_ref, xp_ref, o_ref):
    # ci_ref: (2, 3, Cb)        vertical taps, both output row phases
    # cj_ref: (QJ, 3, Cb)       horizontal taps for this block's column phase(s)
    # xp_ref: (H+2, W+2, Cb)    zero-padded NHWC input block
    # o_ref : (H, 2, W, QJ*Cb)  row-phase-interleaved, lane-dense output block
    xp = xp_ref[...]
    ci = ci_ref[...]
    cj = cj_ref[...]
    hp, wp, _ = xp.shape
    hh, ww = hp - 2, wp - 2
    qj_n = cj.shape[0]

    # The three column-shifted views are materialized once and shared by every
    # phase.  TODO(synk): pltpu.roll along the sublane axis would remove the
    # two off-by-one relayout copies entirely (XLU slot is idle here).
    xs = [xp[:, d:d + ww, :] for d in range(3)]

    # Horizontal (separable) pass: one (H+2, W, Cb) plane per column phase.
    hz = [xs[0] * cj[q, 0][None, None, :]
          + xs[1] * cj[q, 1][None, None, :]
          + xs[2] * cj[q, 2][None, None, :]
          for q in range(qj_n)]
    # Row-shifted views of each plane, shared by both row phases
    # (leading-dim slices: no relayout).
    hzs = [(p[0:hh], p[1:hh + 1], p[2:hh + 2]) for p in hz]

    # Vertical pass; interleave the column phases along the lane axis so each
    # store is a single dense (H, W, QJ*Cb) write at a leading-dim row phase.
    for qi in range(2):
        t0 = ci[qi, 0][None, None, :]
        t1 = ci[qi, 1][None, None, :]
        t2 = ci[qi, 2][None, None, :]
        ys = [a * t0 + b * t1 + c * t2 for (a, b, c) in hzs]
        o_ref[:, qi, :, :] = ys[0] if qj_n == 1 else jnp.concatenate(ys, axis=-1)


def _block_plan(C, H, W):
    """Channel-chunk (lane) size + VMEM limit, sized per TPU generation."""
    try:
        vmem = int(pltpu.get_tpu_info().vmem_capacity_bytes)  # 128 MiB v5e/v6e, 64 MiB v7x
    except Exception:   # no hardware info available -> assume the smallest (v7x)
        vmem = 64 * 1024 * 1024
    in_c = (H + 2) * (W + 2) * 4            # f32 bytes per channel: padded input
    out_c = 4 * H * W * 4                   # f32 bytes per channel: 4 output phases
    budget = vmem // 6                      # double-buffered in+out + relayout temps
    if C * (in_c + out_c) <= budget or C % 128 != 0:
        # One block per batch element: all channels and both column phases per step.
        # TODO(synk): very large C*H*W with C not a multiple of 128 would need row
        # tiling with a +/-1 halo; not required at these model sizes.
        cb = None
        step_bytes = C * (in_c + out_c)
    else:
        per_c = in_c + out_c // 2           # column-phase-split blocks: half the output
        cb = min(C, max(128, (budget // per_c) // 128 * 128))
        while C % cb:
            cb -= 128
        step_bytes = cb * per_c
    limit = int(min(vmem * 3 // 4, max(4 * step_bytes, 32 * 1024 * 1024)))
    return cb, limit


def polyphase_up2d_pallas(x, ci, cj):
    """x: (B, H, W, C) f32 NHWC; ci/cj: (B, 2, 3, C) separable per-phase taps.
    Returns the 2x-upsampled, antialiased activation, (B, 2H, 2W, C) f32."""
    B, H, W, C = x.shape
    xp = jnp.pad(x, ((0, 0), (1, 1), (1, 1), (0, 0)))     # zero 'SAME' halo, once, in HBM
    cb, vmem_limit = _block_plan(C, H, W)

    if cb is None:
        grid = (B,)
        in_specs = [
            pl.BlockSpec((None, 2, 3, C), lambda b: (b, 0, 0, 0)),
            pl.BlockSpec((None, 2, 3, C), lambda b: (b, 0, 0, 0)),
            pl.BlockSpec((None, H + 2, W + 2, C), lambda b: (b, 0, 0, 0)),
        ]
        out_spec = pl.BlockSpec((None, H, 2, W, 2 * C), lambda b: (b, 0, 0, 0, 0))
        semantics = ("parallel",)
    else:
        nk = C // cb
        grid = (B, 2 * nk)                  # column phase major, channel chunk minor
        in_specs = [
            pl.BlockSpec((None, 2, 3, cb), lambda b, k: (b, 0, 0, k % nk)),
            pl.BlockSpec((None, 1, 3, cb), lambda b, k: (b, k // nk, 0, k % nk)),
            pl.BlockSpec((None, H + 2, W + 2, cb), lambda b, k: (b, 0, 0, k % nk)),
        ]
        out_spec = pl.BlockSpec((None, H, 2, W, cb), lambda b, k: (b, 0, 0, 0, k))
        semantics = ("parallel", "parallel")

    out = pl.pallas_call(
        _poly_up_kernel,
        out_shape=jax.ShapeDtypeStruct((B, H, 2, W, 2 * C), jnp.float32),
        grid=grid,
        in_specs=in_specs,
        out_specs=out_spec,
        compiler_params=pltpu.CompilerParams(
            dimension_semantics=semantics, vmem_limit_bytes=vmem_limit),
    )(ci, cj, xp)
    # (B, H, 2, W, 2C) row-major is bit-identical to (B, 2H, 2W, C): free reshape,
    # no post-kernel transpose pass over the full output.
    return out.reshape(B, 2 * H, 2 * W, C)


class PolyphaseInvariantUp2D:
    """Pallas port of PolyphaseInvariantUp2D (stride=2, hard selection, test mode).

    Activations are channels-last (NHWC) so C maps to the TPU lane axis; the
    PyTorch reference is NCHW -- transpose once at the model boundary if needed.
    """

    def __init__(self, in_channels, stride=2, no_antialias=False):
        assert stride == 2
        self.stride = stride
        self.in_channels = in_channels
        self.no_antialias = no_antialias
        if no_antialias:
            # identity tap: pure polyphase scatter, no low-pass and no gain
            # (matches the torch module, which skips the antialias layer entirely).
            v = np.array([0.0, 1.0, 0.0], np.float32)
        else:
            # separable 3x3 binomial LPF with gain stride**2:
            # w = outer([1,2,1],[1,2,1]) / 16 * stride**2 = outer(v, v)
            v = np.array([1.0, 2.0, 1.0], np.float32) * (stride / 4.0)
        # one (3,) separable tap vector per channel -> (C, 3)
        self.taps = jnp.asarray(np.tile(v[None, :], (in_channels, 1)))
        # TODO(synk): bf16 activations (f32 accumulation) would halve HBM traffic on
        # v6e/v7x; kept f32 to match the torch module exactly.

    def _phase_coeffs(self, prob):
        # hard component selection (test mode): argmax over the 4 phase probs.
        # TODO(synk): pass_extras=True learned LPS selection (train / test_convex
        # soft gating) is a constructor-injected torch module not specified here.
        phase = jnp.argmax(prob, axis=-1).astype(jnp.int32)            # (B,)
        pi, pj = phase // 2, phase % 2
        d = jnp.arange(3) - 1                                          # tap offset -1..1
        q = jnp.arange(2)                                              # output phase
        k = jnp.arange(3)

        def factored(p):
            # taps[b, q, d, c] = self.taps[c, 2*d + p_b - q + 1]  (0 if out of range)
            idx = 2 * d[None, None, :] + p[:, None, None] - q[None, :, None] + 1
            onehot = (idx[..., None] == k).astype(jnp.float32)         # (B, 2, 3, 3)
            return jnp.einsum('bqdk,ck->bqdc', onehot, self.taps)      # (B, 2, 3, C)

        return factored(pi), factored(pj)

    def __call__(self, x, ret_prob=False, prob=None):
        assert prob is not None, "prob from the paired downsampling layer is required"
        ci, cj = self._phase_coeffs(prob)
        y = polyphase_up2d_pallas(x, ci, cj)
        return (y, prob) if ret_prob else y


def _reference(x, prob, weight):
    """Pure-JAX reference: explicit zero-insert scatter + depthwise 3x3 conv (NHWC)."""
    B, H, W, C = x.shape
    phase = jnp.argmax(prob, axis=-1)
    pi, pj = phase // 2, phase % 2
    oh_i = (jnp.arange(2)[None, :] == pi[:, None]).astype(x.dtype)     # (B, 2)
    oh_j = (jnp.arange(2)[None, :] == pj[:, None]).astype(x.dtype)
    u = (x[:, :, None, :, None, :]
         * oh_i[:, None, :, None, None, None]
         * oh_j[:, None, None, None, :, None]).reshape(B, 2 * H, 2 * W, C)
    w = weight.transpose(1, 2, 0)[:, :, None, :]                       # (3,3,1,C) HWIO
    return lax.conv_general_dilated(u, w, (1, 1), 'SAME',
                                    feature_group_count=C,
                                    dimension_numbers=('NHWC', 'HWIO', 'NHWC'))


if __name__ == "__main__":
    key = jax.random.PRNGKey(0)
    kx, kp = jax.random.split(key)
    B, C, H, W = 2, 4, 16, 16
    x = jax.random.normal(kx, (B, H, W, C), jnp.float32)
    prob = jax.nn.softmax(jax.random.normal(kp, (B, 4), jnp.float32), axis=-1)

    layer = PolyphaseInvariantUp2D(in_channels=C, stride=2)
    fwd = jax.jit(lambda xx, pp: layer(xx, ret_prob=True, prob=pp))
    out, p = fwd(x, prob)
    out = jax.block_until_ready(out)
    assert out.shape == (B, 2 * H, 2 * W, C)

    weight = layer.taps[:, :, None] * layer.taps[:, None, :]           # (C, 3, 3)
    ref = _reference(x, prob, weight)
    np.testing.assert_allclose(np.asarray(out), np.asarray(ref),
                               rtol=1e-5, atol=1e-5)
    print("KERNEL_OK")
</pallas_src>

<mosaic_0001>
module attributes {stable_mosaic.version = 11 : i64} {
  func.func @_poly_up_kernel(%arg0: i32, %arg1: memref<1x2x3x4xf32, #tpu.memory_space<vmem>>, %arg2: memref<1x2x3x4xf32, #tpu.memory_space<vmem>>, %arg3: memref<1x18x18x4xf32, #tpu.memory_space<vmem>>, %arg4: memref<1x16x2x16x8xf32, #tpu.memory_space<vmem>>) attributes {dimension_semantics = [#tpu.dimension_semantics<parallel>], iteration_bounds = array<i64: 2>, scalar_prefetch = 0 : i64, scratch_operands = 0 : i64, tpu.core_type = #tpu.core_type<tc>, window_params = [{transform_indices = @transform_0, window_bounds = array<i64: 1, 2, 3, 4>}, {transform_indices = @transform_1, window_bounds = array<i64: 1, 2, 3, 4>}, {transform_indices = @transform_2, window_bounds = array<i64: 1, 18, 18, 4>}, {transform_indices = @transform_3, window_bounds = array<i64: 1, 16, 2, 16, 8>}]} {
    %c0 = arith.constant 0 : index
    %c0_0 = arith.constant 0 : index
    %c0_1 = arith.constant 0 : index
    %c0_2 = arith.constant 0 : index
    %0 = vector.load %arg3[%c0, %c0_0, %c0_1, %c0_2] : memref<1x18x18x4xf32, #tpu.memory_space<vmem>>, vector<1x18x18x4xf32>
    %1 = vector.shape_cast %0 : vector<1x18x18x4xf32> to vector<18x18x4xf32>
    %c0_3 = arith.constant 0 : index
    %c0_4 = arith.constant 0 : index
    %c0_5 = arith.constant 0 : index
    %c0_6 = arith.constant 0 : index
    %2 = vector.load %arg1[%c0_3, %c0_4, %c0_5, %c0_6] : memref<1x2x3x4xf32, #tpu.memory_space<vmem>>, vector<1x2x3x4xf32>
    %3 = vector.shape_cast %2 : vector<1x2x3x4xf32> to vector<2x3x4xf32>
    %c0_7 = arith.constant 0 : index
    %c0_8 = arith.constant 0 : index
    %c0_9 = arith.constant 0 : index
    %c0_10 = arith.constant 0 : index
    %4 = vector.load %arg2[%c0_7, %c0_8, %c0_9, %c0_10] : memref<1x2x3x4xf32, #tpu.memory_space<vmem>>, vector<1x2x3x4xf32>
    %5 = vector.shape_cast %4 : vector<1x2x3x4xf32> to vector<2x3x4xf32>
    %6 = vector.extract_strided_slice %1 {offsets = [0, 0, 0], sizes = [18, 16, 4], strides = [1, 1, 1]} : vector<18x18x4xf32> to vector<18x16x4xf32>
    %7 = vector.extract_strided_slice %1 {offsets = [0, 1, 0], sizes = [18, 16, 4], strides = [1, 1, 1]} : vector<18x18x4xf32> to vector<18x16x4xf32>
    %8 = vector.extract_strided_slice %1 {offsets = [0, 2, 0], sizes = [18, 16, 4], strides = [1, 1, 1]} : vector<18x18x4xf32> to vector<18x16x4xf32>
    %9 = vector.extract_strided_slice %5 {offsets = [0, 0, 0], sizes = [1, 1, 4], strides = [1, 1, 1]} : vector<2x3x4xf32> to vector<1x1x4xf32>
    %10 = vector.shape_cast %9 : vector<1x1x4xf32> to vector<4xf32>
    %11 = vector.shape_cast %10 : vector<4xf32> to vector<1x1x4xf32>
    %12 = vector.broadcast %11 : vector<1x1x4xf32> to vector<18x16x4xf32>
    %13 = arith.mulf %6, %12 : vector<18x16x4xf32>
    %14 = vector.extract_strided_slice %5 {offsets = [0, 1, 0], sizes = [1, 1, 4], strides = [1, 1, 1]} : vector<2x3x4xf32> to vector<1x1x4xf32>
    %15 = vector.shape_cast %14 : vector<1x1x4xf32> to vector<4xf32>
    %16 = vector.shape_cast %15 : vector<4xf32> to vector<1x1x4xf32>
    %17 = vector.broadcast %16 : vector<1x1x4xf32> to vector<18x16x4xf32>
    %18 = arith.mulf %7, %17 : vector<18x16x4xf32>
    %19 = arith.addf %13, %18 : vector<18x16x4xf32>
    %20 = vector.extract_strided_slice %5 {offsets = [0, 2, 0], sizes = [1, 1, 4], strides = [1, 1, 1]} : vector<2x3x4xf32> to vector<1x1x4xf32>
    %21 = vector.shape_cast %20 : vector<1x1x4xf32> to vector<4xf32>
    %22 = vector.shape_cast %21 : vector<4xf32> to vector<1x1x4xf32>
    %23 = vector.broadcast %22 : vector<1x1x4xf32> to vector<18x16x4xf32>
    %24 = arith.mulf %8, %23 : vector<18x16x4xf32>
    %25 = arith.addf %19, %24 : vector<18x16x4xf32>
    %26 = vector.extract_strided_slice %5 {offsets = [1, 0, 0], sizes = [1, 1, 4], strides = [1, 1, 1]} : vector<2x3x4xf32> to vector<1x1x4xf32>
    %27 = vector.shape_cast %26 : vector<1x1x4xf32> to vector<4xf32>
    %28 = vector.shape_cast %27 : vector<4xf32> to vector<1x1x4xf32>
    %29 = vector.broadcast %28 : vector<1x1x4xf32> to vector<18x16x4xf32>
    %30 = arith.mulf %6, %29 : vector<18x16x4xf32>
    %31 = vector.extract_strided_slice %5 {offsets = [1, 1, 0], sizes = [1, 1, 4], strides = [1, 1, 1]} : vector<2x3x4xf32> to vector<1x1x4xf32>
    %32 = vector.shape_cast %31 : vector<1x1x4xf32> to vector<4xf32>
    %33 = vector.shape_cast %32 : vector<4xf32> to vector<1x1x4xf32>
    %34 = vector.broadcast %33 : vector<1x1x4xf32> to vector<18x16x4xf32>
    %35 = arith.mulf %7, %34 : vector<18x16x4xf32>
    %36 = arith.addf %30, %35 : vector<18x16x4xf32>
    %37 = vector.extract_strided_slice %5 {offsets = [1, 2, 0], sizes = [1, 1, 4], strides = [1, 1, 1]} : vector<2x3x4xf32> to vector<1x1x4xf32>
    %38 = vector.shape_cast %37 : vector<1x1x4xf32> to vector<4xf32>
    %39 = vector.shape_cast %38 : vector<4xf32> to vector<1x1x4xf32>
    %40 = vector.broadcast %39 : vector<1x1x4xf32> to vector<18x16x4xf32>
    %41 = arith.mulf %8, %40 : vector<18x16x4xf32>
    %42 = arith.addf %36, %41 : vector<18x16x4xf32>
    %43 = vector.extract_strided_slice %25 {offsets = [0, 0, 0], sizes = [16, 16, 4], strides = [1, 1, 1]} : vector<18x16x4xf32> to vector<16x16x4xf32>
    %44 = vector.extract_strided_slice %25 {offsets = [1, 0, 0], sizes = [16, 16, 4], strides = [1, 1, 1]} : vector<18x16x4xf32> to vector<16x16x4xf32>
    %45 = vector.extract_strided_slice %25 {offsets = [2, 0, 0], sizes = [16, 16, 4], strides = [1, 1, 1]} : vector<18x16x4xf32> to vector<16x16x4xf32>
    %46 = vector.extract_strided_slice %42 {offsets = [0, 0, 0], sizes = [16, 16, 4], strides = [1, 1, 1]} : vector<18x16x4xf32> to vector<16x16x4xf32>
    %47 = vector.extract_strided_slice %42 {offsets = [1, 0, 0], sizes = [16, 16, 4], strides = [1, 1, 1]} : vector<18x16x4xf32> to vector<16x16x4xf32>
    %48 = vector.extract_strided_slice %42 {offsets = [2, 0, 0], sizes = [16, 16, 4], strides = [1, 1, 1]} : vector<18x16x4xf32> to vector<16x16x4xf32>
    %49 = vector.extract_strided_slice %3 {offsets = [0, 0, 0], sizes = [1, 1, 4], strides = [1, 1, 1]} : vector<2x3x4xf32> to vector<1x1x4xf32>
    %50 = vector.shape_cast %49 : vector<1x1x4xf32> to vector<4xf32>
    %51 = vector.shape_cast %50 : vector<4xf32> to vector<1x1x4xf32>
    %52 = vector.extract_strided_slice %3 {offsets = [0, 1, 0], sizes = [1, 1, 4], strides = [1, 1, 1]} : vector<2x3x4xf32> to vector<1x1x4xf32>
    %53 = vector.shape_cast %52 : vector<1x1x4xf32> to vector<4xf32>
    %54 = vector.shape_cast %53 : vector<4xf32> to vector<1x1x4xf32>
    %55 = vector.extract_strided_slice %3 {offsets = [0, 2, 0], sizes = [1, 1, 4], strides = [1, 1, 1]} : vector<2x3x4xf32> to vector<1x1x4xf32>
    %56 = vector.shape_cast %55 : vector<1x1x4xf32> to vector<4xf32>
    %57 = vector.shape_cast %56 : vector<4xf32> to vector<1x1x4xf32>
    %58 = vector.broadcast %51 : vector<1x1x4xf32> to vector<16x16x4xf32>
    %59 = arith.mulf %43, %58 : vector<16x16x4xf32>
    %60 = vector.broadcast %54 : vector<1x1x4xf32> to vector<16x16x4xf32>
    %61 = arith.mulf %44, %60 : vector<16x16x4xf32>
    %62 = arith.addf %59, %61 : vector<16x16x4xf32>
    %63 = vector.broadcast %57 : vector<1x1x4xf32> to vector<16x16x4xf32>
    %64 = arith.mulf %45, %63 : vector<16x16x4xf32>
    %65 = arith.addf %62, %64 : vector<16x16x4xf32>
    %66 = vector.broadcast %51 : vector<1x1x4xf32> to vector<16x16x4xf32>
    %67 = arith.mulf %46, %66 : vector<16x16x4xf32>
    %68 = vector.broadcast %54 : vector<1x1x4xf32> to vector<16x16x4xf32>
    %69 = arith.mulf %47, %68 : vector<16x16x4xf32>
    %70 = arith.addf %67, %69 : vector<16x16x4xf32>
    %71 = vector.broadcast %57 : vector<1x1x4xf32> to vector<16x16x4xf32>
    %72 = arith.mulf %48, %71 : vector<16x16x4xf32>
    %73 = arith.addf %70, %72 : vector<16x16x4xf32>
    %74 = tpu.concatenate %65, %73 in 2 : vector<16x16x4xf32>, vector<16x16x4xf32> -> vector<16x16x8xf32>
    %c0_11 = arith.constant 0 : index
    %c0_12 = arith.constant 0 : index
    %c0_13 = arith.constant 0 : index
    %c0_14 = arith.constant 0 : index
    %c0_15 = arith.constant 0 : index
    %75 = vector.load %arg4[%c0_11, %c0_12, %c0_13, %c0_14, %c0_15] : memref<1x16x2x16x8xf32, #tpu.memory_space<vmem>>, vector<1x16x1x16x8xf32>
    %76 = vector.shape_cast %75 : vector<1x16x1x16x8xf32> to vector<16x16x8xf32>
    %77 = vector.shape_cast %74 : vector<16x16x8xf32> to vector<1x16x1x16x8xf32>
    tpu.vector_store %arg4[%c0_11, %c0_12, %c0_13, %c0_14, %c0_15], %77 {strides = array<i32>} : memref<1x16x2x16x8xf32, #tpu.memory_space<vmem>>, vector<1x16x1x16x8xf32>,
    %78 = vector.extract_strided_slice %3 {offsets = [1, 0, 0], sizes = [1, 1, 4], strides = [1, 1, 1]} : vector<2x3x4xf32> to vector<1x1x4xf32>
    %79 = vector.shape_cast %78 : vector<1x1x4xf32> to vector<4xf32>
    %80 = vector.shape_cast %79 : vector<4xf32> to vector<1x1x4xf32>
    %81 = vector.extract_strided_slice %3 {offsets = [1, 1, 0], sizes = [1, 1, 4], strides = [1, 1, 1]} : vector<2x3x4xf32> to vector<1x1x4xf32>
    %82 = vector.shape_cast %81 : vector<1x1x4xf32> to vector<4xf32>
    %83 = vector.shape_cast %82 : vector<4xf32> to vector<1x1x4xf32>
    %84 = vector.extract_strided_slice %3 {offsets = [1, 2, 0], sizes = [1, 1, 4], strides = [1, 1, 1]} : vector<2x3x4xf32> to vector<1x1x4xf32>
    %85 = vector.shape_cast %84 : vector<1x1x4xf32> to vector<4xf32>
    %86 = vector.shape_cast %85 : vector<4xf32> to vector<1x1x4xf32>
    %87 = vector.broadcast %80 : vector<1x1x4xf32> to vector<16x16x4xf32>
    %88 = arith.mulf %43, %87 : vector<16x16x4xf32>
    %89 = vector.broadcast %83 : vector<1x1x4xf32> to vector<16x16x4xf32>
    %90 = arith.mulf %44, %89 : vector<16x16x4xf32>
    %91 = arith.addf %88, %90 : vector<16x16x4xf32>
    %92 = vector.broadcast %86 : vector<1x1x4xf32> to vector<16x16x4xf32>
    %93 = arith.mulf %45, %92 : vector<16x16x4xf32>
    %94 = arith.addf %91, %93 : vector<16x16x4xf32>
    %95 = vector.broadcast %80 : vector<1x1x4xf32> to vector<16x16x4xf32>
    %96 = arith.mulf %46, %95 : vector<16x16x4xf32>
    %97 = vector.broadcast %83 : vector<1x1x4xf32> to vector<16x16x4xf32>
    %98 = arith.mulf %47, %97 : vector<16x16x4xf32>
    %99 = arith.addf %96, %98 : vector<16x16x4xf32>
    %100 = vector.broadcast %86 : vector<1x1x4xf32> to vector<16x16x4xf32>
    %101 = arith.mulf %48, %100 : vector<16x16x4xf32>
    %102 = arith.addf %99, %101 : vector<16x16x4xf32>
    %103 = tpu.concatenate %94, %102 in 2 : vector<16x16x4xf32>, vector<16x16x4xf32> -> vector<16x16x8xf32>
    %c0_16 = arith.constant 0 : index
    %c0_17 = arith.constant 0 : index
    %c1 = arith.constant 1 : index
    %c0_18 = arith.constant 0 : index
    %c0_19 = arith.constant 0 : index
    %104 = vector.load %arg4[%c0_16, %c0_17, %c1, %c0_18, %c0_19] : memref<1x16x2x16x8xf32, #tpu.memory_space<vmem>>, vector<1x16x1x16x8xf32>
    %105 = vector.shape_cast %104 : vector<1x16x1x16x8xf32> to vector<16x16x8xf32>
    %106 = vector.shape_cast %103 : vector<16x16x8xf32> to vector<1x16x1x16x8xf32>
    tpu.vector_store %arg4[%c0_16, %c0_17, %c1, %c0_18, %c0_19], %106 {strides = array<i32>} : memref<1x16x2x16x8xf32, #tpu.memory_space<vmem>>, vector<1x16x1x16x8xf32>,
    return
  }
  func.func @transform_0(%arg0: i32) -> (i32, i32, i32, i32) {
    %c0_i32 = arith.constant 0 : i32
    %c0_i32_0 = arith.constant 0 : i32
    %c0_i32_1 = arith.constant 0 : i32
    %c0_i32_2 = arith.constant 0 : i32
    return %arg0, %c0_i32, %c0_i32_0, %c0_i32_1 : i32, i32, i32, i32
  }
  func.func @transform_1(%arg0: i32) -> (i32, i32, i32, i32) {
    %c0_i32 = arith.constant 0 : i32
    %c0_i32_0 = arith.constant 0 : i32
    %c0_i32_1 = arith.constant 0 : i32
    %c0_i32_2 = arith.constant 0 : i32
    return %arg0, %c0_i32, %c0_i32_0, %c0_i32_1 : i32, i32, i32, i32
  }
  func.func @transform_2(%arg0: i32) -> (i32, i32, i32, i32) {
    %c0_i32 = arith.constant 0 : i32
    %c0_i32_0 = arith.constant 0 : i32
    %c0_i32_1 = arith.constant 0 : i32
    %c0_i32_2 = arith.constant 0 : i32
    return %arg0, %c0_i32, %c0_i32_0, %c0_i32_1 : i32, i32, i32, i32
  }
  func.func @transform_3(%arg0: i32) -> (i32, i32, i32, i32, i32) {
    %c0_i32 = arith.constant 0 : i32
    %c0_i32_0 = arith.constant 0 : i32
    %c0_i32_1 = arith.constant 0 : i32
    %c0_i32_2 = arith.constant 0 : i32
    %c0_i32_3 = arith.constant 0 : i32
    return %arg0, %c0_i32, %c0_i32_0, %c0_i32_1, %c0_i32_2 : i32, i32, i32, i32, i32
  }
}

</mosaic_0001>

<llo_original>
// kernel: _lambda_.1
$region0: #{_lambda_.1}
  #allocation0 [shape = 'u32[]', space=smem, size = 0x4, offset = 0x4, fixed_abs, tag = 'smem constant byte address 0x4 - core index']
  #allocation1 [shape = 'u32[144,128]{1,0:T(1,128)}', space=vmem, size = 0x12000, scoped, tag = 'internal scratch']
  %s0 = inlined_call_operand.vmem [shape: f32[2,2,3,4], index: 0, kind: input, shape index: {}]
  %s1 = inlined_call_operand.vmem [shape: f32[2,2,3,4], index: 1, kind: input, shape index: {}]
  %s2 = inlined_call_operand.vmem [shape: f32[2,18,18,4], index: 2, kind: input, shape index: {}]
  %s3 = inlined_call_operand.vmem [shape: f32[2,16,2,16,8], index: 3, kind: output, shape index: {}]
  %s4 = sld [smem:[#allocation0]]
  $region45: #{_lambda_.1} parent=0
    _
  %s6 = ssub.s32 1, %s4
  %s7 = scalar_select 0, %s6, %s4
  loop: start=0, step=1, limit=4
  $region2: #{_lambda_.1} parent=0 // loop_pre_header
    _
  $region3: #{_lambda_.1} parent=0 // loop_header
    %s9 = sphi 0, %s13
    %p10 = scmp.ge.s32.totalorder %s9, 4
    %s19 = sphi 0, %s21
    %s22 = sphi 0, %s19
    %s23 = sphi 0, %s22
    %s39 = sphi 0, %s23
    %s45 = sphi 0, %s47
    %s48 = sphi 0, %s45
    %s49 = sphi 0, %s48
    %s65 = sphi 0, %s49
    %s71 = sphi 0, %s73
    %s74 = sphi 0, %s71
    %s75 = sphi 0, %s74
    %s91 = sphi 0, %s75
    %s97 = sphi 0, %s99
    %s100 = sphi 0, %s97
    %s101 = sphi 0, %s100
    %s117 = sphi 0, %s101
  $region4: #{_lambda_.1} parent=0 // loop_header_branch
    %12 = sbr.rel (%p10) target = $region8
  $region5: #{_lambda_.1} parent=0 // loop_body
    %s14 = ssub.s32 %s9, 1
    %s15 = ssub.s32 %s9, 2
    %s16 = sadd.s32 %s9, 1
    %s17 = ssub.s32 %s9, %s16
    %p18 = scmp.eq.s32.totalorder %s17, 0
    %s20 = sadd.s32 %s19, 1
    %s21 = scalar_select %p18, %s19, %s20
    %p24 = pneg %p18
    %p25 = scmp.eq.s32.totalorder %s9, 1
    %p26 = por %p24, %p25
    %p27 = scmp.ne.s32.totalorder %s19, %s22
    %p28 = scmp.eq.s32.totalorder %s9, 0
    %p29 = por %p27, %p28
    %p30 = scmp.ne.s32.totalorder %s19, %s22
    %p31 = scmp.eq.s32.totalorder %s14, 1
    %p32 = por %p30, %p31
    %p33 = scmp.ne.s32.totalorder %s22, %s23
    %p34 = scmp.eq.s32.totalorder %s14, 0
    %p35 = por %p33, %p34
    %p36 = scmp.ne.s32.totalorder %s22, %s23
    %p37 = scmp.eq.s32.totalorder %s15, 1
    %p38 = por %p36, %p37
    %p40 = scmp.ne.s32.totalorder %s23, %s39
    %p41 = scmp.eq.s32.totalorder %s15, 0
    %p42 = por %p40, %p41
    %s43 = ssub.s32 %s9, %s16
    %p44 = scmp.eq.s32.totalorder %s43, 0
    %s46 = sadd.s32 %s45, 1
    %s47 = scalar_select %p44, %s45, %s46
    %p50 = pneg %p44
    %p51 = scmp.eq.s32.totalorder %s9, 1
    %p52 = por %p50, %p51
    %p53 = scmp.ne.s32.totalorder %s45, %s48
    %p54 = scmp.eq.s32.totalorder %s9, 0
    %p55 = por %p53, %p54
    %p56 = scmp.ne.s32.totalorder %s45, %s48
    %p57 = scmp.eq.s32.totalorder %s14, 1
    %p58 = por %p56, %p57
    %p59 = scmp.ne.s32.totalorder %s48, %s49
    %p60 = scmp.eq.s32.totalorder %s14, 0
    %p61 = por %p59, %p60
    %p62 = scmp.ne.s32.totalorder %s48, %s49
    %p63 = scmp.eq.s32.totalorder %s15, 1
    %p64 = por %p62, %p63
    %p66 = scmp.ne.s32.totalorder %s49, %s65
    %p67 = scmp.eq.s32.totalorder %s15, 0
    %p68 = por %p66, %p67
    %s69 = ssub.s32 %s9, %s16
    %p70 = scmp.eq.s32.totalorder %s69, 0
    %s72 = sadd.s32 %s71, 1
    %s73 = scalar_select %p70, %s71, %s72
    %p76 = pneg %p70
    %p77 = scmp.eq.s32.totalorder %s9, 1
    %p78 = por %p76, %p77
    %p79 = scmp.ne.s32.totalorder %s71, %s74
    %p80 = scmp.eq.s32.totalorder %s9, 0
    %p81 = por %p79, %p80
    %p82 = scmp.ne.s32.totalorder %s71, %s74
    %p83 = scmp.eq.s32.totalorder %s14, 1
    %p84 = por %p82, %p83
    %p85 = scmp.ne.s32.totalorder %s74, %s75
    %p86 = scmp.eq.s32.totalorder %s14, 0
    %p87 = por %p85, %p86
    %p88 = scmp.ne.s32.totalorder %s74, %s75
    %p89 = scmp.eq.s32.totalorder %s15, 1
    %p90 = por %p88, %p89
    %p92 = scmp.ne.s32.totalorder %s75, %s91
    %p93 = scmp.eq.s32.totalorder %s15, 0
    %p94 = por %p92, %p93
    %s95 = ssub.s32 %s9, %s16
    %p96 = scmp.eq.s32.totalorder %s95, 0
    %s98 = sadd.s32 %s97, 1
    %s99 = scalar_select %p96, %s97, %s98
    %p102 = pneg %p96
    %p103 = scmp.eq.s32.totalorder %s9, 1
    %p104 = por %p102, %p103
    %p105 = scmp.ne.s32.totalorder %s97, %s100
    %p106 = scmp.eq.s32.totalorder %s9, 0
    %p107 = por %p105, %p106
    %p108 = scmp.ne.s32.totalorder %s97, %s100
    %p109 = scmp.eq.s32.totalorder %s14, 1
    %p110 = por %p108, %p109
    %p111 = scmp.ne.s32.totalorder %s100, %s101
    %p112 = scmp.eq.s32.totalorder %s14, 0
    %p113 = por %p111, %p112
    %p114 = scmp.ne.s32.totalorder %s100, %s101
    %p115 = scmp.eq.s32.totalorder %s15, 1
    %p116 = por %p114, %p115
    %p118 = scmp.ne.s32.totalorder %s101, %s117
    %p119 = scmp.eq.s32.totalorder %s15, 0
    %p120 = por %p118, %p119
    %p121 = scmp.le.s32.totalorder 1, %s9
    %p122 = scmp.lt.s32.totalorder %s9, 3
    %p123 = pnand %p121, %p122
    %p124 = pneg %p123
    // Predicated region
    $region9: #{_lambda_.1} parent=5 // pred_check
      _
    $region10: #{_lambda_.1} parent=5 // pred_check_branch
      %126 = sbr.rel (%p123) target = $region12
    $region11: #{_lambda_.1} parent=5 // pred_region
      %s127 = ssub.s32 %s9, 1
    $region12: #{_lambda_.1} parent=5 // pred_fallthru
      _
    %p128 = scmp.lt.s32.totalorder %s9, 2
    // Predicated region
    $region13: #{_lambda_.1} parent=5 // pred_check
      %p129 = pneg %p128
    $region14: #{_lambda_.1} parent=5 // pred_check_branch
      %131 = sbr.rel (%p129) target = $region16
    $region15: #{_lambda_.1} parent=5 // pred_region
      // Predicated region
      $region17: #{_lambda_.1} parent=15 // pred_check
        %p132 = pneg %p29
      $region18: #{_lambda_.1} parent=15 // pred_check_branch
        %134 = sbr.rel (%p132) target = $region20
      $region19: #{_lambda_.1} parent=15 // pred_region
        %p135 = scmp.lt.s32.totalorder %s9, 1
        %s136 = scalar_select %p135, %s9, 1
        %s137 = smul.addr %s136, 2
        %s138 = smul.addr %s137, 4
        %s139 = scalar_lea.vmem %s0, %s138
      $region20: #{_lambda_.1} parent=15 // pred_fallthru
        _
      // Predicated region
      $region21: #{_lambda_.1} parent=15 // pred_check
        %p140 = pneg %p55
      $region22: #{_lambda_.1} parent=15 // pred_check_branch
        %142 = sbr.rel (%p140) target = $region24
      $region23: #{_lambda_.1} parent=15 // pred_region
        %p143 = scmp.lt.s32.totalorder %s9, 1
        %s144 = scalar_select %p143, %s9, 1
        %s145 = smul.addr %s144, 2
        %s146 = smul.addr %s145, 4
        %s147 = scalar_lea.vmem %s1, %s146
      $region24: #{_lambda_.1} parent=15 // pred_fallthru
        _
      // Predicated region
      $region25: #{_lambda_.1} parent=15 // pred_check
        %p148 = pneg %p81
      $region26: #{_lambda_.1} parent=15 // pred_check_branch
        %150 = sbr.rel (%p148) target = $region28
      $region27: #{_lambda_.1} parent=15 // pred_region
        %p151 = scmp.lt.s32.totalorder %s9, 1
        %s152 = scalar_select %p151, %s9, 1
        %s153 = smul.addr %s152, 54
        %s154 = smul.addr %s153, 8
        %s155 = scalar_lea.vmem %s2, %s154
      $region28: #{_lambda_.1} parent=15 // pred_fallthru
        _
    $region16: #{_lambda_.1} parent=5 // pred_fallthru
      _
    %p156 = scmp.le.s32.totalorder 1, %s9
    %p157 = scmp.lt.s32.totalorder %s9, 3
    %p158 = pnand %p156, %p157
    %p159 = pneg %p158
    // Predicated region
    $region29: #{_lambda_.1} parent=5 // pred_check
      _
    $region30: #{_lambda_.1} parent=5 // pred_check_branch
      %161 = sbr.rel (%p158) target = $region32
    $region31: #{_lambda_.1} parent=5 // pred_region
      %s162 = ssub.s32 %s9, 1
      %p163 = scmp.lt.s32.totalorder %s14, 1
      %s164 = scalar_select %p163, %s14, 1
      %s165 = smul.addr %s164, 2
      %s166 = smul.addr %s165, 4
      %s167 = scalar_lea.vmem %s0, %s166
      %p168 = pneg %p35
      %p169 = pneg %p32
      %p170 = scmp.lt.s32.totalorder %s14, 1
      %s171 = scalar_select %p170, %s14, 1
      %s172 = smul.addr %s171, 2
      %s173 = smul.addr %s172, 4
      %s174 = scalar_lea.vmem %s1, %s173
      %p175 = pneg %p61
      %p176 = pneg %p58
      %p177 = scmp.lt.s32.totalorder %s14, 1
      %s178 = scalar_select %p177, %s14, 1
      %s179 = smul.addr %s178, 54
      %s180 = smul.addr %s179, 8
      %s181 = scalar_lea.vmem %s2, %s180
      %p182 = pneg %p87
      %p183 = pneg %p84
      %p184 = pneg %p113
      %p185 = pneg %p110
      %p186 = scmp.lt.s32.totalorder %s14, 1
      %s187 = scalar_select %p186, %s14, 1
      %s188 = smul.addr %s187, 64
      %s189 = smul.addr %s188, 8
      %s190 = scalar_lea.vmem %s3, %s189
      %p191 = scmp.lt.s32.totalorder %s14, 1
      %s192 = scalar_select %p191, %s14, 1
      %s193 = smul.addr %s192, 2
      %s194 = smul.addr %s193, 4
      %s195 = scalar_lea.vmem %s0, %s194
      %p196 = scmp.lt.s32.totalorder %s14, 1
      %s197 = scalar_select %p196, %s14, 1
      %s198 = smul.addr %s197, 2
      %s199 = smul.addr %s198, 4
      %s200 = scalar_lea.vmem %s1, %s199
      %p201 = scmp.lt.s32.totalorder %s14, 1
      %s202 = scalar_select %p201, %s14, 1
      %s203 = smul.addr %s202, 54
      %s204 = smul.addr %s203, 8
      %s205 = scalar_lea.vmem %s2, %s204
      %p206 = scmp.lt.s32.totalorder %s14, 1
      %s207 = scalar_select %p206, %s14, 1
      %s208 = smul.addr %s207, 64
      %s209 = smul.addr %s208, 8
      %s210 = scalar_lea.vmem %s3, %s209
      %v211 = vld [vmem:[%s205] sm:$0xff]
      %v212 = vld [vmem:[%s205 + $0x8] sm:$0xff]
      %v213 = vld [vmem:[%s205 + $0x10] sm:$0x3]
      %v214 = vld [vmem:[%s205 + $0x18] sm:$0xff]
      %v215 = vld [vmem:[%s205 + $0x20] sm:$0xff]
      %v216 = vld [vmem:[%s205 + $0x28] sm:$0x3]
      %v217 = vld [vmem:[%s205 + $0x30] sm:$0xff]
      %v218 = vld [vmem:[%s205 + $0x38] sm:$0xff]
      %v219 = vld [vmem:[%s205 + $0x40] sm:$0x3]
      %v220 = vld [vmem:[%s205 + $0x48] sm:$0xff]
      %v221 = vld [vmem:[%s205 + $0x50] sm:$0xff]
      %v222 = vld [vmem:[%s205 + $0x58] sm:$0x3]
      %v223 = vld [vmem:[%s205 + $0x60] sm:$0xff]
      %v224 = vld [vmem:[%s205 + $0x68] sm:$0xff]
      %v225 = vld [vmem:[%s205 + $0x70] sm:$0x3]
      %v226 = vld [vmem:[%s205 + $0x78] sm:$0xff]
      %v227 = vld [vmem:[%s205 + $0x80] sm:$0xff]
      %v228 = vld [vmem:[%s205 + $0x88] sm:$0x3]
      %v229 = vld [vmem:[%s205 + $0x90] sm:$0xff]
      %v230 = vld [vmem:[%s205 + $0x98] sm:$0xff]
      %v231 = vld [vmem:[%s205 + $0xa0] sm:$0x3]
      %v232 = vld [vmem:[%s205 + $0xa8] sm:$0xff]
      %v233 = vld [vmem:[%s205 + $0xb0] sm:$0xff]
      %v234 = vld [vmem:[%s205 + $0xb8] sm:$0x3]
      %v235 = vld [vmem:[%s205 + $0xc0] sm:$0xff]
      %v236 = vld [vmem:[%s205 + $0xc8] sm:$0xff]
      %v237 = vld [vmem:[%s205 + $0xd0] sm:$0x3]
      %v238 = vld [vmem:[%s205 + $0xd8] sm:$0xff]
      %v239 = vld [vmem:[%s205 + $0xe0] sm:$0xff]
      %v240 = vld [vmem:[%s205 + $0xe8] sm:$0x3]
      %v241 = vld [vmem:[%s205 + $0xf0] sm:$0xff]
      %v242 = vld [vmem:[%s205 + $0xf8] sm:$0xff]
      %v243 = vld [vmem:[%s205 + $0x100] sm:$0x3]
      %v244 = vld [vmem:[%s205 + $0x108] sm:$0xff]
      %v245 = vld [vmem:[%s205 + $0x110] sm:$0xff]
      %v246 = vld [vmem:[%s205 + $0x118] sm:$0x3]
      %v247 = vld [vmem:[%s205 + $0x120] sm:$0xff]
      %v248 = vld [vmem:[%s205 + $0x128] sm:$0xff]
      %v249 = vld [vmem:[%s205 + $0x130] sm:$0x3]
      %v250 = vld [vmem:[%s205 + $0x138] sm:$0xff]
      %v251 = vld [vmem:[%s205 + $0x140] sm:$0xff]
      %v252 = vld [vmem:[%s205 + $0x148] sm:$0x3]
      %v253 = vld [vmem:[%s205 + $0x150] sm:$0xff]
      %v254 = vld [vmem:[%s205 + $0x158] sm:$0xff]
      %v255 = vld [vmem:[%s205 + $0x160] sm:$0x3]
      %v256 = vld [vmem:[%s205 + $0x168] sm:$0xff]
      %v257 = vld [vmem:[%s205 + $0x170] sm:$0xff]
      %v258 = vld [vmem:[%s205 + $0x178] sm:$0x3]
      %v259 = vld [vmem:[%s205 + $0x180] sm:$0xff]
      %v260 = vld [vmem:[%s205 + $0x188] sm:$0xff]
      %v261 = vld [vmem:[%s205 + $0x190] sm:$0x3]
      %v262 = vld [vmem:[%s205 + $0x198] sm:$0xff]
      %v263 = vld [vmem:[%s205 + $0x1a0] sm:$0xff]
      %v264 = vld [vmem:[%s205 + $0x1a8] sm:$0x3]
      %v265 = vld [vmem:[%s195] sm:$0x7]
      %v266 = vld [vmem:[%s195 + $0x4] sm:$0x7]
      %v267 = vld [vmem:[%s200] sm:$0x7]
      %v268 = vld [vmem:[%s200 + $0x4] sm:$0x7]
      %v269 = vlaneseq
      %v270 = vshrl.u32 %v269, 7
      %v271 = vsub.s32 0, %v270
      %v272 = vrot.slane %v267, %v271
      %v273 = vmul.f32 %v211, %v272
      %v274 = vmul.f32 %v212, %v272
      %v275 = vmul.f32 %v214, %v272
      %v276 = vmul.f32 %v215, %v272
      %v277 = vmul.f32 %v217, %v272
      %v278 = vmul.f32 %v218, %v272
      %v279 = vmul.f32 %v220, %v272
      %v280 = vmul.f32 %v221, %v272
      %v281 = vmul.f32 %v223, %v272
      %v282 = vmul.f32 %v224, %v272
      %v283 = vmul.f32 %v226, %v272
      %v284 = vmul.f32 %v227, %v272
      %v285 = vmul.f32 %v229, %v272
      %v286 = vmul.f32 %v230, %v272
      %v287 = vmul.f32 %v232, %v272
      %v288 = vmul.f32 %v233, %v272
      %v289 = vmul.f32 %v235, %v272
      %v290 = vmul.f32 %v236, %v272
      %v291 = vmul.f32 %v238, %v272
      %v292 = vmul.f32 %v239, %v272
      %v293 = vmul.f32 %v241, %v272
      %v294 = vmul.f32 %v242, %v272
      %v295 = vmul.f32 %v244, %v272
      %v296 = vmul.f32 %v245, %v272
      %v297 = vmul.f32 %v247, %v272
      %v298 = vmul.f32 %v248, %v272
      %v299 = vmul.f32 %v250, %v272
      %v300 = vmul.f32 %v251, %v272
      %v301 = vmul.f32 %v253, %v272
      %v302 = vmul.f32 %v254, %v272
      %v303 = vmul.f32 %v256, %v272
      %v304 = vmul.f32 %v257, %v272
      %v305 = vmul.f32 %v259, %v272
      %v306 = vmul.f32 %v260, %v272
      %v307 = vmul.f32 %v262, %v272
      %v308 = vmul.f32 %v263, %v272
      %v309 = vlaneseq
      %v310 = vshrl.u32 %v309, 7
      %v311 = vsub.s32 1, %v310
      %v312 = vrot.slane %v267, %v311
      %v313 = vmul.f32 %v211, %v312
      %v314 = vmul.f32 %v212, %v312
      %v315 = vmul.f32 %v213, %v312
      %v316 = vmul.f32 %v214, %v312
      %v317 = vmul.f32 %v215, %v312
      %v318 = vmul.f32 %v216, %v312
      %v319 = vmul.f32 %v217, %v312
      %v320 = vmul.f32 %v218, %v312
      %v321 = vmul.f32 %v219, %v312
      %v322 = vmul.f32 %v220, %v312
      %v323 = vmul.f32 %v221, %v312
      %v324 = vmul.f32 %v222, %v312
      %v325 = vmul.f32 %v223, %v312
      %v326 = vmul.f32 %v224, %v312
      %v327 = vmul.f32 %v225, %v312
      %v328 = vmul.f32 %v226, %v312
      %v329 = vmul.f32 %v227, %v312
      %v330 = vmul.f32 %v228, %v312
      %v331 = vmul.f32 %v229, %v312
      %v332 = vmul.f32 %v230, %v312
      %v333 = vmul.f32 %v231, %v312
      %v334 = vmul.f32 %v232, %v312
      %v335 = vmul.f32 %v233, %v312
      %v336 = vmul.f32 %v234, %v312
      %v337 = vmul.f32 %v235, %v312
      %v338 = vmul.f32 %v236, %v312
      %v339 = vmul.f32 %v237, %v312
      %v340 = vmul.f32 %v238, %v312
      %v341 = vmul.f32 %v239, %v312
      %v342 = vmul.f32 %v240, %v312
      %v343 = vmul.f32 %v241, %v312
      %v344 = vmul.f32 %v242, %v312
      %v345 = vmul.f32 %v243, %v312
      %v346 = vmul.f32 %v244, %v312
      %v347 = vmul.f32 %v245, %v312
      %v348 = vmul.f32 %v246, %v312
      %v349 = vmul.f32 %v247, %v312
      %v350 = vmul.f32 %v248, %v312
      %v351 = vmul.f32 %v249, %v312
      %v352 = vmul.f32 %v250, %v312
      %v353 = vmul.f32 %v251, %v312
      %v354 = vmul.f32 %v252, %v312
      %v355 = vmul.f32 %v253, %v312
      %v356 = vmul.f32 %v254, %v312
      %v357 = vmul.f32 %v255, %v312
      %v358 = vmul.f32 %v256, %v312
      %v359 = vmul.f32 %v257, %v312
      %v360 = vmul.f32 %v258, %v312
      %v361 = vmul.f32 %v259, %v312
      %v362 = vmul.f32 %v260, %v312
      %v363 = vmul.f32 %v261, %v312
      %v364 = vmul.f32 %v262, %v312
      %v365 = vmul.f32 %v263, %v312
      %v366 = vmul.f32 %v264, %v312
      %vm421 = vcmask 1046528
      %v422 = vrot.slane %v313, 1
      %v423 = vrot.slane %v314, 1
      %v424 = vsel %vm421, %v422, %v423
      %v425 = vrot.slane %v315, 1
      %v426 = vsel %vm421, %v423, %v425
      %v427 = vrot.slane %v316, 1
      %v428 = vrot.slane %v317, 1
      %v429 = vsel %vm421, %v427, %v428
      %v430 = vrot.slane %v318, 1
      %v431 = vsel %vm421, %v428, %v430
      %v432 = vrot.slane %v319, 1
      %v433 = vrot.slane %v320, 1
      %v434 = vsel %vm421, %v432, %v433
      %v435 = vrot.slane %v321, 1
      %v436 = vsel %vm421, %v433, %v435
      %v437 = vrot.slane %v322, 1
      %v438 = vrot.slane %v323, 1
      %v439 = vsel %vm421, %v437, %v438
      %v440 = vrot.slane %v324, 1
      %v441 = vsel %vm421, %v438, %v440
      %v442 = vrot.slane %v325, 1
      %v443 = vrot.slane %v326, 1
      %v444 = vsel %vm421, %v442, %v443
      %v445 = vrot.slane %v327, 1
      %v446 = vsel %vm421, %v443, %v445
      %v447 = vrot.slane %v328, 1
      %v448 = vrot.slane %v329, 1
      %v449 = vsel %vm421, %v447, %v448
      %v450 = vrot.slane %v330, 1
      %v451 = vsel %vm421, %v448, %v450
      %v452 = vrot.slane %v331, 1
      %v453 = vrot.slane %v332, 1
      %v454 = vsel %vm421, %v452, %v453
      %v455 = vrot.slane %v333, 1
      %v456 = vsel %vm421, %v453, %v455
      %v457 = vrot.slane %v334, 1
      %v458 = vrot.slane %v335, 1
      %v459 = vsel %vm421, %v457, %v458
      %v460 = vrot.slane %v336, 1
      %v461 = vsel %vm421, %v458, %v460
      %v462 = vrot.slane %v337, 1
      %v463 = vrot.slane %v338, 1
      %v464 = vsel %vm421, %v462, %v463
      %v465 = vrot.slane %v339, 1
      %v466 = vsel %vm421, %v463, %v465
      %v467 = vrot.slane %v340, 1
      %v468 = vrot.slane %v341, 1
      %v469 = vsel %vm421, %v467, %v468
      %v470 = vrot.slane %v342, 1
      %v471 = vsel %vm421, %v468, %v470
      %v472 = vrot.slane %v343, 1
      %v473 = vrot.slane %v344, 1
      %v474 = vsel %vm421, %v472, %v473
      %v475 = vrot.slane %v345, 1
      %v476 = vsel %vm421, %v473, %v475
      %v477 = vrot.slane %v346, 1
      %v478 = vrot.slane %v347, 1
      %v479 = vsel %vm421, %v477, %v478
      %v480 = vrot.slane %v348, 1
      %v481 = vsel %vm421, %v478, %v480
      %v482 = vrot.slane %v349, 1
      %v483 = vrot.slane %v350, 1
      %v484 = vsel %vm421, %v482, %v483
      %v485 = vrot.slane %v351, 1
      %v486 = vsel %vm421, %v483, %v485
      %v487 = vrot.slane %v352, 1
      %v488 = vrot.slane %v353, 1
      %v489 = vsel %vm421, %v487, %v488
      %v490 = vrot.slane %v354, 1
      %v491 = vsel %vm421, %v488, %v490
      %v492 = vrot.slane %v355, 1
      %v493 = vrot.slane %v356, 1
      %v494 = vsel %vm421, %v492, %v493
      %v495 = vrot.slane %v357, 1
      %v496 = vsel %vm421, %v493, %v495
      %v497 = vrot.slane %v358, 1
      %v498 = vrot.slane %v359, 1
      %v499 = vsel %vm421, %v497, %v498
      %v500 = vrot.slane %v360, 1
      %v501 = vsel %vm421, %v498, %v500
      %v502 = vrot.slane %v361, 1
      %v503 = vrot.slane %v362, 1
      %v504 = vsel %vm421, %v502, %v503
      %v505 = vrot.slane %v363, 1
      %v506 = vsel %vm421, %v503, %v505
      %v507 = vrot.slane %v364, 1
      %v508 = vrot.slane %v365, 1
      %v509 = vsel %vm421, %v507, %v508
      %v510 = vrot.slane %v366, 1
      %v511 = vsel %vm421, %v508, %v510
      %v548 = vadd.f32 %v273, %v424
      %v549 = vadd.f32 %v274, %v426
      %v550 = vadd.f32 %v275, %v429
      %v551 = vadd.f32 %v276, %v431
      %v552 = vadd.f32 %v277, %v434
      %v553 = vadd.f32 %v278, %v436
      %v554 = vadd.f32 %v279, %v439
      %v555 = vadd.f32 %v280, %v441
      %v556 = vadd.f32 %v281, %v444
      %v557 = vadd.f32 %v282, %v446
      %v558 = vadd.f32 %v283, %v449
      %v559 = vadd.f32 %v284, %v451
      %v560 = vadd.f32 %v285, %v454
      %v561 = vadd.f32 %v286, %v456
      %v562 = vadd.f32 %v287, %v459
      %v563 = vadd.f32 %v288, %v461
      %v564 = vadd.f32 %v289, %v464
      %v565 = vadd.f32 %v290, %v466
      %v566 = vadd.f32 %v291, %v469
      %v567 = vadd.f32 %v292, %v471
      %v568 = vadd.f32 %v293, %v474
      %v569 = vadd.f32 %v294, %v476
      %v570 = vadd.f32 %v295, %v479
      %v571 = vadd.f32 %v296, %v481
      %v572 = vadd.f32 %v297, %v484
      %v573 = vadd.f32 %v298, %v486
      %v574 = vadd.f32 %v299, %v489
      %v575 = vadd.f32 %v300, %v491
      %v576 = vadd.f32 %v301, %v494
      %v577 = vadd.f32 %v302, %v496
      %v578 = vadd.f32 %v303, %v499
      %v579 = vadd.f32 %v304, %v501
      %v580 = vadd.f32 %v305, %v504
      %v581 = vadd.f32 %v306, %v506
      %v582 = vadd.f32 %v307, %v509
      %v583 = vadd.f32 %v308, %v511
      %v584 = vlaneseq
      %v585 = vshrl.u32 %v584, 7
      %v586 = vsub.s32 2, %v585
      %v587 = vrot.slane %v267, %v586
      %v588 = vmul.f32 %v211, %v587
      %v589 = vmul.f32 %v212, %v587
      %v590 = vmul.f32 %v213, %v587
      %v591 = vmul.f32 %v214, %v587
      %v592 = vmul.f32 %v215, %v587
      %v593 = vmul.f32 %v216, %v587
      %v594 = vmul.f32 %v217, %v587
      %v595 = vmul.f32 %v218, %v587
      %v596 = vmul.f32 %v219, %v587
      %v597 = vmul.f32 %v220, %v587
      %v598 = vmul.f32 %v221, %v587
      %v599 = vmul.f32 %v222, %v587
      %v600 = vmul.f32 %v223, %v587
      %v601 = vmul.f32 %v224, %v587
      %v602 = vmul.f32 %v225, %v587
      %v603 = vmul.f32 %v226, %v587
      %v604 = vmul.f32 %v227, %v587
      %v605 = vmul.f32 %v228, %v587
      %v606 = vmul.f32 %v229, %v587
      %v607 = vmul.f32 %v230, %v587
      %v608 = vmul.f32 %v231, %v587
      %v609 = vmul.f32 %v232, %v587
      %v610 = vmul.f32 %v233, %v587
      %v611 = vmul.f32 %v234, %v587
      %v612 = vmul.f32 %v235, %v587
      %v613 = vmul.f32 %v236, %v587
      %v614 = vmul.f32 %v237, %v587
      %v615 = vmul.f32 %v238, %v587
      %v616 = vmul.f32 %v239, %v587
      %v617 = vmul.f32 %v240, %v587
      %v618 = vmul.f32 %v241, %v587
      %v619 = vmul.f32 %v242, %v587
      %v620 = vmul.f32 %v243, %v587
      %v621 = vmul.f32 %v244, %v587
      %v622 = vmul.f32 %v245, %v587
      %v623 = vmul.f32 %v246, %v587
      %v624 = vmul.f32 %v247, %v587
      %v625 = vmul.f32 %v248, %v587
      %v626 = vmul.f32 %v249, %v587
      %v627 = vmul.f32 %v250, %v587
      %v628 = vmul.f32 %v251, %v587
      %v629 = vmul.f32 %v252, %v587
      %v630 = vmul.f32 %v253, %v587
      %v631 = vmul.f32 %v254, %v587
      %v632 = vmul.f32 %v255, %v587
      %v633 = vmul.f32 %v256, %v587
      %v634 = vmul.f32 %v257, %v587
      %v635 = vmul.f32 %v258, %v587
      %v636 = vmul.f32 %v259, %v587
      %v637 = vmul.f32 %v260, %v587
      %v638 = vmul.f32 %v261, %v587
      %v639 = vmul.f32 %v262, %v587
      %v640 = vmul.f32 %v263, %v587
      %v641 = vmul.f32 %v264, %v587
      %vm696 = vcmask 1045504
      %v697 = vrot.slane %v588, 2
      %v698 = vrot.slane %v589, 2
      %v699 = vsel %vm696, %v697, %v698
      %v700 = vrot.slane %v590, 2
      %v701 = vsel %vm696, %v698, %v700
      %v702 = vrot.slane %v591, 2
      %v703 = vrot.slane %v592, 2
      %v704 = vsel %vm696, %v702, %v703
      %v705 = vrot.slane %v593, 2
      %v706 = vsel %vm696, %v703, %v705
      %v707 = vrot.slane %v594, 2
      %v708 = vrot.slane %v595, 2
      %v709 = vsel %vm696, %v707, %v708
      %v710 = vrot.slane %v596, 2
      %v711 = vsel %vm696, %v708, %v710
      %v712 = vrot.slane %v597, 2
      %v713 = vrot.slane %v598, 2
      %v714 = vsel %vm696, %v712, %v713
      %v715 = vrot.slane %v599, 2
      %v716 = vsel %vm696, %v713, %v715
      %v717 = vrot.slane %v600, 2
      %v718 = vrot.slane %v601, 2
      %v719 = vsel %vm696, %v717, %v718
      %v720 = vrot.slane %v602, 2
      %v721 = vsel %vm696, %v718, %v720
      %v722 = vrot.slane %v603, 2
      %v723 = vrot.slane %v604, 2
      %v724 = vsel %vm696, %v722, %v723
      %v725 = vrot.slane %v605, 2
      %v726 = vsel %vm696, %v723, %v725
      %v727 = vrot.slane %v606, 2
      %v728 = vrot.slane %v607, 2
      %v729 = vsel %vm696, %v727, %v728
      %v730 = vrot.slane %v608, 2
      %v731 = vsel %vm696, %v728, %v730
      %v732 = vrot.slane %v609, 2
      %v733 = vrot.slane %v610, 2
      %v734 = vsel %vm696, %v732, %v733
      %v735 = vrot.slane %v611, 2
      %v736 = vsel %vm696, %v733, %v735
      %v737 = vrot.slane %v612, 2
      %v738 = vrot.slane %v613, 2
      %v739 = vsel %vm696, %v737, %v738
      %v740 = vrot.slane %v614, 2
      %v741 = vsel %vm696, %v738, %v740
      %v742 = vrot.slane %v615, 2
      %v743 = vrot.slane %v616, 2
      %v744 = vsel %vm696, %v742, %v743
      %v745 = vrot.slane %v617, 2
      %v746 = vsel %vm696, %v743, %v745
      %v747 = vrot.slane %v618, 2
      %v748 = vrot.slane %v619, 2
      %v749 = vsel %vm696, %v747, %v748
      %v750 = vrot.slane %v620, 2
      %v751 = vsel %vm696, %v748, %v750
      %v752 = vrot.slane %v621, 2
      %v753 = vrot.slane %v622, 2
      %v754 = vsel %vm696, %v752, %v753
      %v755 = vrot.slane %v623, 2
      %v756 = vsel %vm696, %v753, %v755
      %v757 = vrot.slane %v624, 2
      %v758 = vrot.slane %v625, 2
      %v759 = vsel %vm696, %v757, %v758
      %v760 = vrot.slane %v626, 2
      %v761 = vsel %vm696, %v758, %v760
      %v762 = vrot.slane %v627, 2
      %v763 = vrot.slane %v628, 2
      %v764 = vsel %vm696, %v762, %v763
      %v765 = vrot.slane %v629, 2
      %v766 = vsel %vm696, %v763, %v765
      %v767 = vrot.slane %v630, 2
      %v768 = vrot.slane %v631, 2
      %v769 = vsel %vm696, %v767, %v768
      %v770 = vrot.slane %v632, 2
      %v771 = vsel %vm696, %v768, %v770
      %v772 = vrot.slane %v633, 2
      %v773 = vrot.slane %v634, 2
      %v774 = vsel %vm696, %v772, %v773
      %v775 = vrot.slane %v635, 2
      %v776 = vsel %vm696, %v773, %v775
      %v777 = vrot.slane %v636, 2
      %v778 = vrot.slane %v637, 2
      %v779 = vsel %vm696, %v777, %v778
      %v780 = vrot.slane %v638, 2
      %v781 = vsel %vm696, %v778, %v780
      %v782 = vrot.slane %v639, 2
      %v783 = vrot.slane %v640, 2
      %v784 = vsel %vm696, %v782, %v783
      %v785 = vrot.slane %v641, 2
      %v786 = vsel %vm696, %v783, %v785
      %v823 = vadd.f32 %v548, %v699
      %v824 = vadd.f32 %v549, %v701
      %v825 = vadd.f32 %v550, %v704
      %v826 = vadd.f32 %v551, %v706
      %v827 = vadd.f32 %v552, %v709
      %v828 = vadd.f32 %v553, %v711
      %v829 = vadd.f32 %v554, %v714
      %v830 = vadd.f32 %v555, %v716
      %v831 = vadd.f32 %v556, %v719
      %v832 = vadd.f32 %v557, %v721
      %v833 = vadd.f32 %v558, %v724
      %v834 = vadd.f32 %v559, %v726
      %v835 = vadd.f32 %v560, %v729
      %v836 = vadd.f32 %v561, %v731
      %v837 = vadd.f32 %v562, %v734
      %v838 = vadd.f32 %v563, %v736
      %v839 = vadd.f32 %v564, %v739
      %v840 = vadd.f32 %v565, %v741
      %v841 = vadd.f32 %v566, %v744
      %v842 = vadd.f32 %v567, %v746
      %v843 = vadd.f32 %v568, %v749
      %v844 = vadd.f32 %v569, %v751
      %v845 = vadd.f32 %v570, %v754
      %v846 = vadd.f32 %v571, %v756
      %v847 = vadd.f32 %v572, %v759
      %v848 = vadd.f32 %v573, %v761
      %v849 = vadd.f32 %v574, %v764
      %v850 = vadd.f32 %v575, %v766
      %v851 = vadd.f32 %v576, %v769
      %v852 = vadd.f32 %v577, %v771
      %v853 = vadd.f32 %v578, %v774
      %v854 = vadd.f32 %v579, %v776
      %v855 = vadd.f32 %v580, %v779
      %v856 = vadd.f32 %v581, %v781
      %v857 = vadd.f32 %v582, %v784
      %v858 = vadd.f32 %v583, %v786
      %v859 = vlaneseq
      %v860 = vshrl.u32 %v859, 7
      %v861 = vsub.s32 0, %v860
      %v862 = vrot.slane %v268, %v861
      %v863 = vmul.f32 %v211, %v862
      %v864 = vmul.f32 %v212, %v862
      %v865 = vmul.f32 %v214, %v862
      %v866 = vmul.f32 %v215, %v862
      %v867 = vmul.f32 %v217, %v862
      %v868 = vmul.f32 %v218, %v862
      %v869 = vmul.f32 %v220, %v862
      %v870 = vmul.f32 %v221, %v862
      %v871 = vmul.f32 %v223, %v862
      %v872 = vmul.f32 %v224, %v862
      %v873 = vmul.f32 %v226, %v862
      %v874 = vmul.f32 %v227, %v862
      %v875 = vmul.f32 %v229, %v862
      %v876 = vmul.f32 %v230, %v862
      %v877 = vmul.f32 %v232, %v862
      %v878 = vmul.f32 %v233, %v862
      %v879 = vmul.f32 %v235, %v862
      %v880 = vmul.f32 %v236, %v862
      %v881 = vmul.f32 %v238, %v862
      %v882 = vmul.f32 %v239, %v862
      %v883 = vmul.f32 %v241, %v862
      %v884 = vmul.f32 %v242, %v862
      %v885 = vmul.f32 %v244, %v862
      %v886 = vmul.f32 %v245, %v862
      %v887 = vmul.f32 %v247, %v862
      %v888 = vmul.f32 %v248, %v862
      %v889 = vmul.f32 %v250, %v862
      %v890 = vmul.f32 %v251, %v862
      %v891 = vmul.f32 %v253, %v862
      %v892 = vmul.f32 %v254, %v862
      %v893 = vmul.f32 %v256, %v862
      %v894 = vmul.f32 %v257, %v862
      %v895 = vmul.f32 %v259, %v862
      %v896 = vmul.f32 %v260, %v862
      %v897 = vmul.f32 %v262, %v862
      %v898 = vmul.f32 %v263, %v862
      %v899 = vlaneseq
      %v900 = vshrl.u32 %v899, 7
      %v901 = vsub.s32 1, %v900
      %v902 = vrot.slane %v268, %v901
      %v903 = vmul.f32 %v211, %v902
      %v904 = vmul.f32 %v212, %v902
      %v905 = vmul.f32 %v213, %v902
      %v906 = vmul.f32 %v214, %v902
      %v907 = vmul.f32 %v215, %v902
      %v908 = vmul.f32 %v216, %v902
      %v909 = vmul.f32 %v217, %v902
      %v910 = vmul.f32 %v218, %v902
      %v911 = vmul.f32 %v219, %v902
      %v912 = vmul.f32 %v220, %v902
      %v913 = vmul.f32 %v221, %v902
      %v914 = vmul.f32 %v222, %v902
      %v915 = vmul.f32 %v223, %v902
      %v916 = vmul.f32 %v224, %v902
      %v917 = vmul.f32 %v225, %v902
      %v918 = vmul.f32 %v226, %v902
      %v919 = vmul.f32 %v227, %v902
      %v920 = vmul.f32 %v228, %v902
      %v921 = vmul.f32 %v229, %v902
      %v922 = vmul.f32 %v230, %v902
      %v923 = vmul.f32 %v231, %v902
      %v924 = vmul.f32 %v232, %v902
      %v925 = vmul.f32 %v233, %v902
      %v926 = vmul.f32 %v234, %v902
      %v927 = vmul.f32 %v235, %v902
      %v928 = vmul.f32 %v236, %v902
      %v929 = vmul.f32 %v237, %v902
      %v930 = vmul.f32 %v238, %v902
      %v931 = vmul.f32 %v239, %v902
      %v932 = vmul.f32 %v240, %v902
      %v933 = vmul.f32 %v241, %v902
      %v934 = vmul.f32 %v242, %v902
      %v935 = vmul.f32 %v243, %v902
      %v936 = vmul.f32 %v244, %v902
      %v937 = vmul.f32 %v245, %v902
      %v938 = vmul.f32 %v246, %v902
      %v939 = vmul.f32 %v247, %v902
      %v940 = vmul.f32 %v248, %v902
      %v941 = vmul.f32 %v249, %v902
      %v942 = vmul.f32 %v250, %v902
      %v943 = vmul.f32 %v251, %v902
      %v944 = vmul.f32 %v252, %v902
      %v945 = vmul.f32 %v253, %v902
      %v946 = vmul.f32 %v254, %v902
      %v947 = vmul.f32 %v255, %v902
      %v948 = vmul.f32 %v256, %v902
      %v949 = vmul.f32 %v257, %v902
      %v950 = vmul.f32 %v258, %v902
      %v951 = vmul.f32 %v259, %v902
      %v952 = vmul.f32 %v260, %v902
      %v953 = vmul.f32 %v261, %v902
      %v954 = vmul.f32 %v262, %v902
      %v955 = vmul.f32 %v263, %v902
      %v956 = vmul.f32 %v264, %v902
      %v1011 = vrot.slane %v903, 1
      %v1012 = vrot.slane %v904, 1
      %v1013 = vsel %vm421, %v1011, %v1012
      %v1014 = vrot.slane %v905, 1
      %v1015 = vsel %vm421, %v1012, %v1014
      %v1016 = vrot.slane %v906, 1
      %v1017 = vrot.slane %v907, 1
      %v1018 = vsel %vm421, %v1016, %v1017
      %v1019 = vrot.slane %v908, 1
      %v1020 = vsel %vm421, %v1017, %v1019
      %v1021 = vrot.slane %v909, 1
      %v1022 = vrot.slane %v910, 1
      %v1023 = vsel %vm421, %v1021, %v1022
      %v1024 = vrot.slane %v911, 1
      %v1025 = vsel %vm421, %v1022, %v1024
      %v1026 = vrot.slane %v912, 1
      %v1027 = vrot.slane %v913, 1
      %v1028 = vsel %vm421, %v1026, %v1027
      %v1029 = vrot.slane %v914, 1
      %v1030 = vsel %vm421, %v1027, %v1029
      %v1031 = vrot.slane %v915, 1
      %v1032 = vrot.slane %v916, 1
      %v1033 = vsel %vm421, %v1031, %v1032
      %v1034 = vrot.slane %v917, 1
      %v1035 = vsel %vm421, %v1032, %v1034
      %v1036 = vrot.slane %v918, 1
      %v1037 = vrot.slane %v919, 1
      %v1038 = vsel %vm421, %v1036, %v1037
      %v1039 = vrot.slane %v920, 1
      %v1040 = vsel %vm421, %v1037, %v1039
      %v1041 = vrot.slane %v921, 1
      %v1042 = vrot.slane %v922, 1
      %v1043 = vsel %vm421, %v1041, %v1042
      %v1044 = vrot.slane %v923, 1
      %v1045 = vsel %vm421, %v1042, %v1044
      %v1046 = vrot.slane %v924, 1
      %v1047 = vrot.slane %v925, 1
      %v1048 = vsel %vm421, %v1046, %v1047
      %v1049 = vrot.slane %v926, 1
      %v1050 = vsel %vm421, %v1047, %v1049
      %v1051 = vrot.slane %v927, 1
      %v1052 = vrot.slane %v928, 1
      %v1053 = vsel %vm421, %v1051, %v1052
      %v1054 = vrot.slane %v929, 1
      %v1055 = vsel %vm421, %v1052, %v1054
      %v1056 = vrot.slane %v930, 1
      %v1057 = vrot.slane %v931, 1
      %v1058 = vsel %vm421, %v1056, %v1057
      %v1059 = vrot.slane %v932, 1
      %v1060 = vsel %vm421, %v1057, %v1059
      %v1061 = vrot.slane %v933, 1
      %v1062 = vrot.slane %v934, 1
      %v1063 = vsel %vm421, %v1061, %v1062
      %v1064 = vrot.slane %v935, 1
      %v1065 = vsel %vm421, %v1062, %v1064
      %v1066 = vrot.slane %v936, 1
      %v1067 = vrot.slane %v937, 1
      %v1068 = vsel %vm421, %v1066, %v1067
      %v1069 = vrot.slane %v938, 1
      %v1070 = vsel %vm421, %v1067, %v1069
      %v1071 = vrot.slane %v939, 1
      %v1072 = vrot.slane %v940, 1
      %v1073 = vsel %vm421, %v1071, %v1072
      %v1074 = vrot.slane %v941, 1
      %v1075 = vsel %vm421, %v1072, %v1074
      %v1076 = vrot.slane %v942, 1
      %v1077 = vrot.slane %v943, 1
      %v1078 = vsel %vm421, %v1076, %v1077
      %v1079 = vrot.slane %v944, 1
      %v1080 = vsel %vm421, %v1077, %v1079
      %v1081 = vrot.slane %v945, 1
      %v1082 = vrot.slane %v946, 1
      %v1083 = vsel %vm421, %v1081, %v1082
      %v1084 = vrot.slane %v947, 1
      %v1085 = vsel %vm421, %v1082, %v1084
      %v1086 = vrot.slane %v948, 1
      %v1087 = vrot.slane %v949, 1
      %v1088 = vsel %vm421, %v1086, %v1087
      %v1089 = vrot.slane %v950, 1
      %v1090 = vsel %vm421, %v1087, %v1089
      %v1091 = vrot.slane %v951, 1
      %v1092 = vrot.slane %v952, 1
      %v1093 = vsel %vm421, %v1091, %v1092
      %v1094 = vrot.slane %v953, 1
      %v1095 = vsel %vm421, %v1092, %v1094
      %v1096 = vrot.slane %v954, 1
      %v1097 = vrot.slane %v955, 1
      %v1098 = vsel %vm421, %v1096, %v1097
      %v1099 = vrot.slane %v956, 1
      %v1100 = vsel %vm421, %v1097, %v1099
      %v1137 = vadd.f32 %v863, %v1013
      %v1138 = vadd.f32 %v864, %v1015
      %v1139 = vadd.f32 %v865, %v1018
      %v1140 = vadd.f32 %v866, %v1020
      %v1141 = vadd.f32 %v867, %v1023
      %v1142 = vadd.f32 %v868, %v1025
      %v1143 = vadd.f32 %v869, %v1028
      %v1144 = vadd.f32 %v870, %v1030
      %v1145 = vadd.f32 %v871, %v1033
      %v1146 = vadd.f32 %v872, %v1035
      %v1147 = vadd.f32 %v873, %v1038
      %v1148 = vadd.f32 %v874, %v1040
      %v1149 = vadd.f32 %v875, %v1043
      %v1150 = vadd.f32 %v876, %v1045
      %v1151 = vadd.f32 %v877, %v1048
      %v1152 = vadd.f32 %v878, %v1050
      %v1153 = vadd.f32 %v879, %v1053
      %v1154 = vadd.f32 %v880, %v1055
      %v1155 = vadd.f32 %v881, %v1058
      %v1156 = vadd.f32 %v882, %v1060
      %v1157 = vadd.f32 %v883, %v1063
      %v1158 = vadd.f32 %v884, %v1065
      %v1159 = vadd.f32 %v885, %v1068
      %v1160 = vadd.f32 %v886, %v1070
      %v1161 = vadd.f32 %v887, %v1073
      %v1162 = vadd.f32 %v888, %v1075
      %v1163 = vadd.f32 %v889, %v1078
      %v1164 = vadd.f32 %v890, %v1080
      %v1165 = vadd.f32 %v891, %v1083
      %v1166 = vadd.f32 %v892, %v1085
      %v1167 = vadd.f32 %v893, %v1088
      %v1168 = vadd.f32 %v894, %v1090
      %v1169 = vadd.f32 %v895, %v1093
      %v1170 = vadd.f32 %v896, %v1095
      %v1171 = vadd.f32 %v897, %v1098
      %v1172 = vadd.f32 %v898, %v1100
      %v1173 = vlaneseq
      %v1174 = vshrl.u32 %v1173, 7
      %v1175 = vsub.s32 2, %v1174
      %v1176 = vrot.slane %v268, %v1175
      %v1177 = vmul.f32 %v211, %v1176
      %v1178 = vmul.f32 %v212, %v1176
      %v1179 = vmul.f32 %v213, %v1176
      %v1180 = vmul.f32 %v214, %v1176
      %v1181 = vmul.f32 %v215, %v1176
      %v1182 = vmul.f32 %v216, %v1176
      %v1183 = vmul.f32 %v217, %v1176
      %v1184 = vmul.f32 %v218, %v1176
      %v1185 = vmul.f32 %v219, %v1176
      %v1186 = vmul.f32 %v220, %v1176
      %v1187 = vmul.f32 %v221, %v1176
      %v1188 = vmul.f32 %v222, %v1176
      %v1189 = vmul.f32 %v223, %v1176
      %v1190 = vmul.f32 %v224, %v1176
      %v1191 = vmul.f32 %v225, %v1176
      %v1192 = vmul.f32 %v226, %v1176
      %v1193 = vmul.f32 %v227, %v1176
      %v1194 = vmul.f32 %v228, %v1176
      %v1195 = vmul.f32 %v229, %v1176
      %v1196 = vmul.f32 %v230, %v1176
      %v1197 = vmul.f32 %v231, %v1176
      %v1198 = vmul.f32 %v232, %v1176
      %v1199 = vmul.f32 %v233, %v1176
      %v1200 = vmul.f32 %v234, %v1176
      %v1201 = vmul.f32 %v235, %v1176
      %v1202 = vmul.f32 %v236, %v1176
      %v1203 = vmul.f32 %v237, %v1176
      %v1204 = vmul.f32 %v238, %v1176
      %v1205 = vmul.f32 %v239, %v1176
      %v1206 = vmul.f32 %v240, %v1176
      %v1207 = vmul.f32 %v241, %v1176
      %v1208 = vmul.f32 %v242, %v1176
      %v1209 = vmul.f32 %v243, %v1176
      %v1210 = vmul.f32 %v244, %v1176
      %v1211 = vmul.f32 %v245, %v1176
      %v1212 = vmul.f32 %v246, %v1176
      %v1213 = vmul.f32 %v247, %v1176
      %v1214 = vmul.f32 %v248, %v1176
      %v1215 = vmul.f32 %v249, %v1176
      %v1216 = vmul.f32 %v250, %v1176
      %v1217 = vmul.f32 %v251, %v1176
      %v1218 = vmul.f32 %v252, %v1176
      %v1219 = vmul.f32 %v253, %v1176
      %v1220 = vmul.f32 %v254, %v1176
      %v1221 = vmul.f32 %v255, %v1176
      %v1222 = vmul.f32 %v256, %v1176
      %v1223 = vmul.f32 %v257, %v1176
      %v1224 = vmul.f32 %v258, %v1176
      %v1225 = vmul.f32 %v259, %v1176
      %v1226 = vmul.f32 %v260, %v1176
      %v1227 = vmul.f32 %v261, %v1176
      %v1228 = vmul.f32 %v262, %v1176
      %v1229 = vmul.f32 %v263, %v1176
      %v1230 = vmul.f32 %v264, %v1176
      %v1285 = vrot.slane %v1177, 2
      %v1286 = vrot.slane %v1178, 2
      %v1287 = vsel %vm696, %v1285, %v1286
      %v1288 = vrot.slane %v1179, 2
      %v1289 = vsel %vm696, %v1286, %v1288
      %v1290 = vrot.slane %v1180, 2
      %v1291 = vrot.slane %v1181, 2
      %v1292 = vsel %vm696, %v1290, %v1291
      %v1293 = vrot.slane %v1182, 2
      %v1294 = vsel %vm696, %v1291, %v1293
      %v1295 = vrot.slane %v1183, 2
      %v1296 = vrot.slane %v1184, 2
      %v1297 = vsel %vm696, %v1295, %v1296
      %v1298 = vrot.slane %v1185, 2
      %v1299 = vsel %vm696, %v1296, %v1298
      %v1300 = vrot.slane %v1186, 2
      %v1301 = vrot.slane %v1187, 2
      %v1302 = vsel %vm696, %v1300, %v1301
      %v1303 = vrot.slane %v1188, 2
      %v1304 = vsel %vm696, %v1301, %v1303
      %v1305 = vrot.slane %v1189, 2
      %v1306 = vrot.slane %v1190, 2
      %v1307 = vsel %vm696, %v1305, %v1306
      %v1308 = vrot.slane %v1191, 2
      %v1309 = vsel %vm696, %v1306, %v1308
      %v1310 = vrot.slane %v1192, 2
      %v1311 = vrot.slane %v1193, 2
      %v1312 = vsel %vm696, %v1310, %v1311
      %v1313 = vrot.slane %v1194, 2
      %v1314 = vsel %vm696, %v1311, %v1313
      %v1315 = vrot.slane %v1195, 2
      %v1316 = vrot.slane %v1196, 2
      %v1317 = vsel %vm696, %v1315, %v1316
      %v1318 = vrot.slane %v1197, 2
      %v1319 = vsel %vm696, %v1316, %v1318
      %v1320 = vrot.slane %v1198, 2
      %v1321 = vrot.slane %v1199, 2
      %v1322 = vsel %vm696, %v1320, %v1321
      %v1323 = vrot.slane %v1200, 2
      %v1324 = vsel %vm696, %v1321, %v1323
      %v1325 = vrot.slane %v1201, 2
      %v1326 = vrot.slane %v1202, 2
      %v1327 = vsel %vm696, %v1325, %v1326
      %v1328 = vrot.slane %v1203, 2
      %v1329 = vsel %vm696, %v1326, %v1328
      %v1330 = vrot.slane %v1204, 2
      %v1331 = vrot.slane %v1205, 2
      %v1332 = vsel %vm696, %v1330, %v1331
      %v1333 = vrot.slane %v1206, 2
      %v1334 = vsel %vm696, %v1331, %v1333
      %v1335 = vrot.slane %v1207, 2
      %v1336 = vrot.slane %v1208, 2
      %v1337 = vsel %vm696, %v1335, %v1336
      %v1338 = vrot.slane %v1209, 2
      %v1339 = vsel %vm696, %v1336, %v1338
      %v1340 = vrot.slane %v1210, 2
      %v1341 = vrot.slane %v1211, 2
      %v1342 = vsel %vm696, %v1340, %v1341
      %v1343 = vrot.slane %v1212, 2
      %v1344 = vsel %vm696, %v1341, %v1343
      %v1345 = vrot.slane %v1213, 2
      %v1346 = vrot.slane %v1214, 2
      %v1347 = vsel %vm696, %v1345, %v1346
      %v1348 = vrot.slane %v1215, 2
      %v1349 = vsel %vm696, %v1346, %v1348
      %v1350 = vrot.slane %v1216, 2
      %v1351 = vrot.slane %v1217, 2
      %v1352 = vsel %vm696, %v1350, %v1351
      %v1353 = vrot.slane %v1218, 2
      %v1354 = vsel %vm696, %v1351, %v1353
      %v1355 = vrot.slane %v1219, 2
      %v1356 = vrot.slane %v1220, 2
      %v1357 = vsel %vm696, %v1355, %v1356
      %v1358 = vrot.slane %v1221, 2
      %v1359 = vsel %vm696, %v1356, %v1358
      %v1360 = vrot.slane %v1222, 2
      %v1361 = vrot.slane %v1223, 2
      %v1362 = vsel %vm696, %v1360, %v1361
      %v1363 = vrot.slane %v1224, 2
      %v1364 = vsel %vm696, %v1361, %v1363
      %v1365 = vrot.slane %v1225, 2
      %v1366 = vrot.slane %v1226, 2
      %v1367 = vsel %vm696, %v1365, %v1366
      %v1368 = vrot.slane %v1227, 2
      %v1369 = vsel %vm696, %v1366, %v1368
      %v1370 = vrot.slane %v1228, 2
      %v1371 = vrot.slane %v1229, 2
      %v1372 = vsel %vm696, %v1370, %v1371
      %v1373 = vrot.slane %v1230, 2
      %v1374 = vsel %vm696, %v1371, %v1373
      %v1411 = vadd.f32 %v1137, %v1287
      %v1412 = vadd.f32 %v1138, %v1289
      %v1413 = vadd.f32 %v1139, %v1292
      %v1414 = vadd.f32 %v1140, %v1294
      %v1415 = vadd.f32 %v1141, %v1297
      %v1416 = vadd.f32 %v1142, %v1299
      %v1417 = vadd.f32 %v1143, %v1302
      %v1418 = vadd.f32 %v1144, %v1304
      %v1419 = vadd.f32 %v1145, %v1307
      %v1420 = vadd.f32 %v1146, %v1309
      %v1421 = vadd.f32 %v1147, %v1312
      %v1422 = vadd.f32 %v1148, %v1314
      %v1423 = vadd.f32 %v1149, %v1317
      %v1424 = vadd.f32 %v1150, %v1319
      %v1425 = vadd.f32 %v1151, %v1322
      %v1426 = vadd.f32 %v1152, %v1324
      %v1427 = vadd.f32 %v1153, %v1327
      %v1428 = vadd.f32 %v1154, %v1329
      %v1429 = vadd.f32 %v1155, %v1332
      %v1430 = vadd.f32 %v1156, %v1334
      %v1431 = vadd.f32 %v1157, %v1337
      %v1432 = vadd.f32 %v1158, %v1339
      %v1433 = vadd.f32 %v1159, %v1342
      %v1434 = vadd.f32 %v1160, %v1344
      %v1435 = vadd.f32 %v1161, %v1347
      %v1436 = vadd.f32 %v1162, %v1349
      %v1437 = vadd.f32 %v1163, %v1352
      %v1438 = vadd.f32 %v1164, %v1354
      %v1439 = vadd.f32 %v1165, %v1357
      %v1440 = vadd.f32 %v1166, %v1359
      %v1441 = vadd.f32 %v1167, %v1362
      %v1442 = vadd.f32 %v1168, %v1364
      %v1443 = vadd.f32 %v1169, %v1367
      %v1444 = vadd.f32 %v1170, %v1369
      %v1445 = vadd.f32 %v1171, %v1372
      %v1446 = vadd.f32 %v1172, %v1374
      %v1447 = vlaneseq
      %v1448 = vshrl.u32 %v1447, 7
      %v1449 = vsub.s32 0, %v1448
      %v1450 = vrot.slane %v265, %v1449
      %v1451 = vmul.f32 %v823, %v1450
      %v1452 = vmul.f32 %v824, %v1450
      %v1453 = vmul.f32 %v825, %v1450
      %v1454 = vmul.f32 %v826, %v1450
      %v1455 = vmul.f32 %v827, %v1450
      %v1456 = vmul.f32 %v828, %v1450
      %v1457 = vmul.f32 %v829, %v1450
      %v1458 = vmul.f32 %v830, %v1450
      %v1459 = vmul.f32 %v831, %v1450
      %v1460 = vmul.f32 %v832, %v1450
      %v1461 = vmul.f32 %v833, %v1450
      %v1462 = vmul.f32 %v834, %v1450
      %v1463 = vmul.f32 %v835, %v1450
      %v1464 = vmul.f32 %v836, %v1450
      %v1465 = vmul.f32 %v837, %v1450
      %v1466 = vmul.f32 %v838, %v1450
      %v1467 = vmul.f32 %v839, %v1450
      %v1468 = vmul.f32 %v840, %v1450
      %v1469 = vmul.f32 %v841, %v1450
      %v1470 = vmul.f32 %v842, %v1450
      %v1471 = vmul.f32 %v843, %v1450
      %v1472 = vmul.f32 %v844, %v1450
      %v1473 = vmul.f32 %v845, %v1450
      %v1474 = vmul.f32 %v846, %v1450
      %v1475 = vmul.f32 %v847, %v1450
      %v1476 = vmul.f32 %v848, %v1450
      %v1477 = vmul.f32 %v849, %v1450
      %v1478 = vmul.f32 %v850, %v1450
      %v1479 = vmul.f32 %v851, %v1450
      %v1480 = vmul.f32 %v852, %v1450
      %v1481 = vmul.f32 %v853, %v1450
      %v1482 = vmul.f32 %v854, %v1450
      %v1483 = vlaneseq
      %v1484 = vshrl.u32 %v1483, 7
      %v1485 = vsub.s32 1, %v1484
      %v1486 = vrot.slane %v265, %v1485
      %v1487 = vmul.f32 %v825, %v1486
      %v1488 = vmul.f32 %v826, %v1486
      %v1489 = vmul.f32 %v827, %v1486
      %v1490 = vmul.f32 %v828, %v1486
      %v1491 = vmul.f32 %v829, %v1486
      %v1492 = vmul.f32 %v830, %v1486
      %v1493 = vmul.f32 %v831, %v1486
      %v1494 = vmul.f32 %v832, %v1486
      %v1495 = vmul.f32 %v833, %v1486
      %v1496 = vmul.f32 %v834, %v1486
      %v1497 = vmul.f32 %v835, %v1486
      %v1498 = vmul.f32 %v836, %v1486
      %v1499 = vmul.f32 %v837, %v1486
      %v1500 = vmul.f32 %v838, %v1486
      %v1501 = vmul.f32 %v839, %v1486
      %v1502 = vmul.f32 %v840, %v1486
      %v1503 = vmul.f32 %v841, %v1486
      %v1504 = vmul.f32 %v842, %v1486
      %v1505 = vmul.f32 %v843, %v1486
      %v1506 = vmul.f32 %v844, %v1486
      %v1507 = vmul.f32 %v845, %v1486
      %v1508 = vmul.f32 %v846, %v1486
      %v1509 = vmul.f32 %v847, %v1486
      %v1510 = vmul.f32 %v848, %v1486
      %v1511 = vmul.f32 %v849, %v1486
      %v1512 = vmul.f32 %v850, %v1486
      %v1513 = vmul.f32 %v851, %v1486
      %v1514 = vmul.f32 %v852, %v1486
      %v1515 = vmul.f32 %v853, %v1486
      %v1516 = vmul.f32 %v854, %v1486
      %v1517 = vmul.f32 %v855, %v1486
      %v1518 = vmul.f32 %v856, %v1486
      %v1519 = vadd.f32 %v1451, %v1487
      %v1520 = vadd.f32 %v1452, %v1488
      %v1521 = vadd.f32 %v1453, %v1489
      %v1522 = vadd.f32 %v1454, %v1490
      %v1523 = vadd.f32 %v1455, %v1491
      %v1524 = vadd.f32 %v1456, %v1492
      %v1525 = vadd.f32 %v1457, %v1493
      %v1526 = vadd.f32 %v1458, %v1494
      %v1527 = vadd.f32 %v1459, %v1495
      %v1528 = vadd.f32 %v1460, %v1496
      %v1529 = vadd.f32 %v1461, %v1497
      %v1530 = vadd.f32 %v1462, %v1498
      %v1531 = vadd.f32 %v1463, %v1499
      %v1532 = vadd.f32 %v1464, %v1500
      %v1533 = vadd.f32 %v1465, %v1501
      %v1534 = vadd.f32 %v1466, %v1502
      %v1535 = vadd.f32 %v1467, %v1503
      %v1536 = vadd.f32 %v1468, %v1504
      %v1537 = vadd.f32 %v1469, %v1505
      %v1538 = vadd.f32 %v1470, %v1506
      %v1539 = vadd.f32 %v1471, %v1507
      %v1540 = vadd.f32 %v1472, %v1508
      %v1541 = vadd.f32 %v1473, %v1509
      %v1542 = vadd.f32 %v1474, %v1510
      %v1543 = vadd.f32 %v1475, %v1511
      %v1544 = vadd.f32 %v1476, %v1512
      %v1545 = vadd.f32 %v1477, %v1513
      %v1546 = vadd.f32 %v1478, %v1514
      %v1547 = vadd.f32 %v1479, %v1515
      %v1548 = vadd.f32 %v1480, %v1516
      %v1549 = vadd.f32 %v1481, %v1517
      %v1550 = vadd.f32 %v1482, %v1518
      %v1551 = vlaneseq
      %v1552 = vshrl.u32 %v1551, 7
      %v1553 = vsub.s32 2, %v1552
      %v1554 = vrot.slane %v265, %v1553
      %v1555 = vmul.f32 %v827, %v1554
      %v1556 = vmul.f32 %v828, %v1554
      %v1557 = vmul.f32 %v829, %v1554
      %v1558 = vmul.f32 %v830, %v1554
      %v1559 = vmul.f32 %v831, %v1554
      %v1560 = vmul.f32 %v832, %v1554
      %v1561 = vmul.f32 %v833, %v1554
      %v1562 = vmul.f32 %v834, %v1554
      %v1563 = vmul.f32 %v835, %v1554
      %v1564 = vmul.f32 %v836, %v1554
      %v1565 = vmul.f32 %v837, %v1554
      %v1566 = vmul.f32 %v838, %v1554
      %v1567 = vmul.f32 %v839, %v1554
      %v1568 = vmul.f32 %v840, %v1554
      %v1569 = vmul.f32 %v841, %v1554
      %v1570 = vmul.f32 %v842, %v1554
      %v1571 = vmul.f32 %v843, %v1554
      %v1572 = vmul.f32 %v844, %v1554
      %v1573 = vmul.f32 %v845, %v1554
      %v1574 = vmul.f32 %v846, %v1554
      %v1575 = vmul.f32 %v847, %v1554
      %v1576 = vmul.f32 %v848, %v1554
      %v1577 = vmul.f32 %v849, %v1554
      %v1578 = vmul.f32 %v850, %v1554
      %v1579 = vmul.f32 %v851, %v1554
      %v1580 = vmul.f32 %v852, %v1554
      %v1581 = vmul.f32 %v853, %v1554
      %v1582 = vmul.f32 %v854, %v1554
      %v1583 = vmul.f32 %v855, %v1554
      %v1584 = vmul.f32 %v856, %v1554
      %v1585 = vmul.f32 %v857, %v1554
      %v1586 = vmul.f32 %v858, %v1554
      %v1587 = vadd.f32 %v1519, %v1555
      %v1588 = vadd.f32 %v1520, %v1556
      %v1589 = vadd.f32 %v1521, %v1557
      %v1590 = vadd.f32 %v1522, %v1558
      %v1591 = vadd.f32 %v1523, %v1559
      %v1592 = vadd.f32 %v1524, %v1560
      %v1593 = vadd.f32 %v1525, %v1561
      %v1594 = vadd.f32 %v1526, %v1562
      %v1595 = vadd.f32 %v1527, %v1563
      %v1596 = vadd.f32 %v1528, %v1564
      %v1597 = vadd.f32 %v1529, %v1565
      %v1598 = vadd.f32 %v1530, %v1566
      %v1599 = vadd.f32 %v1531, %v1567
      %v1600 = vadd.f32 %v1532, %v1568
      %v1601 = vadd.f32 %v1533, %v1569
      %v1602 = vadd.f32 %v1534, %v1570
      %v1603 = vadd.f32 %v1535, %v1571
      %v1604 = vadd.f32 %v1536, %v1572
      %v1605 = vadd.f32 %v1537, %v1573
      %v1606 = vadd.f32 %v1538, %v1574
      %v1607 = vadd.f32 %v1539, %v1575
      %v1608 = vadd.f32 %v1540, %v1576
      %v1609 = vadd.f32 %v1541, %v1577
      %v1610 = vadd.f32 %v1542, %v1578
      %v1611 = vadd.f32 %v1543, %v1579
      %v1612 = vadd.f32 %v1544, %v1580
      %v1613 = vadd.f32 %v1545, %v1581
      %v1614 = vadd.f32 %v1546, %v1582
      %v1615 = vadd.f32 %v1547, %v1583
      %v1616 = vadd.f32 %v1548, %v1584
      %v1617 = vadd.f32 %v1549, %v1585
      %v1618 = vadd.f32 %v1550, %v1586
      %v1619 = vmul.f32 %v1411, %v1450
      %v1620 = vmul.f32 %v1412, %v1450
      %v1621 = vmul.f32 %v1413, %v1450
      %v1622 = vmul.f32 %v1414, %v1450
      %v1623 = vmul.f32 %v1415, %v1450
      %v1624 = vmul.f32 %v1416, %v1450
      %v1625 = vmul.f32 %v1417, %v1450
      %v1626 = vmul.f32 %v1418, %v1450
      %v1627 = vmul.f32 %v1419, %v1450
      %v1628 = vmul.f32 %v1420, %v1450
      %v1629 = vmul.f32 %v1421, %v1450
      %v1630 = vmul.f32 %v1422, %v1450
      %v1631 = vmul.f32 %v1423, %v1450
      %v1632 = vmul.f32 %v1424, %v1450
      %v1633 = vmul.f32 %v1425, %v1450
      %v1634 = vmul.f32 %v1426, %v1450
      %v1635 = vmul.f32 %v1427, %v1450
      %v1636 = vmul.f32 %v1428, %v1450
      %v1637 = vmul.f32 %v1429, %v1450
      %v1638 = vmul.f32 %v1430, %v1450
      %v1639 = vmul.f32 %v1431, %v1450
      %v1640 = vmul.f32 %v1432, %v1450
      %v1641 = vmul.f32 %v1433, %v1450
      %v1642 = vmul.f32 %v1434, %v1450
      %v1643 = vmul.f32 %v1435, %v1450
      %v1644 = vmul.f32 %v1436, %v1450
      %v1645 = vmul.f32 %v1437, %v1450
      %v1646 = vmul.f32 %v1438, %v1450
      %v1647 = vmul.f32 %v1439, %v1450
      %v1648 = vmul.f32 %v1440, %v1450
      %v1649 = vmul.f32 %v1441, %v1450
      %v1650 = vmul.f32 %v1442, %v1450
      %v1651 = vmul.f32 %v1413, %v1486
      %v1652 = vmul.f32 %v1414, %v1486
      %v1653 = vmul.f32 %v1415, %v1486
      %v1654 = vmul.f32 %v1416, %v1486
      %v1655 = vmul.f32 %v1417, %v1486
      %v1656 = vmul.f32 %v1418, %v1486
      %v1657 = vmul.f32 %v1419, %v1486
      %v1658 = vmul.f32 %v1420, %v1486
      %v1659 = vmul.f32 %v1421, %v1486
      %v1660 = vmul.f32 %v1422, %v1486
      %v1661 = vmul.f32 %v1423, %v1486
      %v1662 = vmul.f32 %v1424, %v1486
      %v1663 = vmul.f32 %v1425, %v1486
      %v1664 = vmul.f32 %v1426, %v1486
      %v1665 = vmul.f32 %v1427, %v1486
      %v1666 = vmul.f32 %v1428, %v1486
      %v1667 = vmul.f32 %v1429, %v1486
      %v1668 = vmul.f32 %v1430, %v1486
      %v1669 = vmul.f32 %v1431, %v1486
      %v1670 = vmul.f32 %v1432, %v1486
      %v1671 = vmul.f32 %v1433, %v1486
      %v1672 = vmul.f32 %v1434, %v1486
      %v1673 = vmul.f32 %v1435, %v1486
      %v1674 = vmul.f32 %v1436, %v1486
      %v1675 = vmul.f32 %v1437, %v1486
      %v1676 = vmul.f32 %v1438, %v1486
      %v1677 = vmul.f32 %v1439, %v1486
      %v1678 = vmul.f32 %v1440, %v1486
      %v1679 = vmul.f32 %v1441, %v1486
      %v1680 = vmul.f32 %v1442, %v1486
      %v1681 = vmul.f32 %v1443, %v1486
      %v1682 = vmul.f32 %v1444, %v1486
      %v1683 = vadd.f32 %v1619, %v1651
      %v1684 = vadd.f32 %v1620, %v1652
      %v1685 = vadd.f32 %v1621, %v1653
      %v1686 = vadd.f32 %v1622, %v1654
      %v1687 = vadd.f32 %v1623, %v1655
      %v1688 = vadd.f32 %v1624, %v1656
      %v1689 = vadd.f32 %v1625, %v1657
      %v1690 = vadd.f32 %v1626, %v1658
      %v1691 = vadd.f32 %v1627, %v1659
      %v1692 = vadd.f32 %v1628, %v1660
      %v1693 = vadd.f32 %v1629, %v1661
      %v1694 = vadd.f32 %v1630, %v1662
      %v1695 = vadd.f32 %v1631, %v1663
      %v1696 = vadd.f32 %v1632, %v1664
      %v1697 = vadd.f32 %v1633, %v1665
      %v1698 = vadd.f32 %v1634, %v1666
      %v1699 = vadd.f32 %v1635, %v1667
      %v1700 = vadd.f32 %v1636, %v1668
      %v1701 = vadd.f32 %v1637, %v1669
      %v1702 = vadd.f32 %v1638, %v1670
      %v1703 = vadd.f32 %v1639, %v1671
      %v1704 = vadd.f32 %v1640, %v1672
      %v1705 = vadd.f32 %v1641, %v1673
      %v1706 = vadd.f32 %v1642, %v1674
      %v1707 = vadd.f32 %v1643, %v1675
      %v1708 = vadd.f32 %v1644, %v1676
      %v1709 = vadd.f32 %v1645, %v1677
      %v1710 = vadd.f32 %v1646, %v1678
      %v1711 = vadd.f32 %v1647, %v1679
      %v1712 = vadd.f32 %v1648, %v1680
      %v1713 = vadd.f32 %v1649, %v1681
      %v1714 = vadd.f32 %v1650, %v1682
      %v1715 = vmul.f32 %v1415, %v1554
      %v1716 = vmul.f32 %v1416, %v1554
      %v1717 = vmul.f32 %v1417, %v1554
      %v1718 = vmul.f32 %v1418, %v1554
      %v1719 = vmul.f32 %v1419, %v1554
      %v1720 = vmul.f32 %v1420, %v1554
      %v1721 = vmul.f32 %v1421, %v1554
      %v1722 = vmul.f32 %v1422, %v1554
      %v1723 = vmul.f32 %v1423, %v1554
      %v1724 = vmul.f32 %v1424, %v1554
      %v1725 = vmul.f32 %v1425, %v1554
      %v1726 = vmul.f32 %v1426, %v1554
      %v1727 = vmul.f32 %v1427, %v1554
      %v1728 = vmul.f32 %v1428, %v1554
      %v1729 = vmul.f32 %v1429, %v1554
      %v1730 = vmul.f32 %v1430, %v1554
      %v1731 = vmul.f32 %v1431, %v1554
      %v1732 = vmul.f32 %v1432, %v1554
      %v1733 = vmul.f32 %v1433, %v1554
      %v1734 = vmul.f32 %v1434, %v1554
      %v1735 = vmul.f32 %v1435, %v1554
      %v1736 = vmul.f32 %v1436, %v1554
      %v1737 = vmul.f32 %v1437, %v1554
      %v1738 = vmul.f32 %v1438, %v1554
      %v1739 = vmul.f32 %v1439, %v1554
      %v1740 = vmul.f32 %v1440, %v1554
      %v1741 = vmul.f32 %v1441, %v1554
      %v1742 = vmul.f32 %v1442, %v1554
      %v1743 = vmul.f32 %v1443, %v1554
      %v1744 = vmul.f32 %v1444, %v1554
      %v1745 = vmul.f32 %v1445, %v1554
      %v1746 = vmul.f32 %v1446, %v1554
      %v1747 = vadd.f32 %v1683, %v1715
      %v1748 = vadd.f32 %v1684, %v1716
      %v1749 = vadd.f32 %v1685, %v1717
      %v1750 = vadd.f32 %v1686, %v1718
      %v1751 = vadd.f32 %v1687, %v1719
      %v1752 = vadd.f32 %v1688, %v1720
      %v1753 = vadd.f32 %v1689, %v1721
      %v1754 = vadd.f32 %v1690, %v1722
      %v1755 = vadd.f32 %v1691, %v1723
      %v1756 = vadd.f32 %v1692, %v1724
      %v1757 = vadd.f32 %v1693, %v1725
      %v1758 = vadd.f32 %v1694, %v1726
      %v1759 = vadd.f32 %v1695, %v1727
      %v1760 = vadd.f32 %v1696, %v1728
      %v1761 = vadd.f32 %v1697, %v1729
      %v1762 = vadd.f32 %v1698, %v1730
      %v1763 = vadd.f32 %v1699, %v1731
      %v1764 = vadd.f32 %v1700, %v1732
      %v1765 = vadd.f32 %v1701, %v1733
      %v1766 = vadd.f32 %v1702, %v1734
      %v1767 = vadd.f32 %v1703, %v1735
      %v1768 = vadd.f32 %v1704, %v1736
      %v1769 = vadd.f32 %v1705, %v1737
      %v1770 = vadd.f32 %v1706, %v1738
      %v1771 = vadd.f32 %v1707, %v1739
      %v1772 = vadd.f32 %v1708, %v1740
      %v1773 = vadd.f32 %v1709, %v1741
      %v1774 = vadd.f32 %v1710, %v1742
      %v1775 = vadd.f32 %v1711, %v1743
      %v1776 = vadd.f32 %v1712, %v1744
      %v1777 = vadd.f32 %v1713, %v1745
      %v1778 = vadd.f32 %v1714, %v1746
      %1811 = vrot.lane.b32.xlu0 %v1747, 4
      %v1812 = vpop.permute.xlu0 %1811
      %1813 = vrot.lane.b32.xlu0 %v1748, 4
      %v1814 = vpop.permute.xlu0 %1813
      %1815 = vrot.lane.b32.xlu0 %v1749, 4
      %v1816 = vpop.permute.xlu0 %1815
      %1817 = vrot.lane.b32.xlu0 %v1750, 4
      %v1818 = vpop.permute.xlu0 %1817
      %1819 = vrot.lane.b32.xlu0 %v1751, 4
      %v1820 = vpop.permute.xlu0 %1819
      %1821 = vrot.lane.b32.xlu0 %v1752, 4
      %v1822 = vpop.permute.xlu0 %1821
      %1823 = vrot.lane.b32.xlu0 %v1753, 4
      %v1824 = vpop.permute.xlu0 %1823
      %1825 = vrot.lane.b32.xlu0 %v1754, 4
      %v1826 = vpop.permute.xlu0 %1825
      %1827 = vrot.lane.b32.xlu0 %v1755, 4
      %v1828 = vpop.permute.xlu0 %1827
      %1829 = vrot.lane.b32.xlu0 %v1756, 4
      %v1830 = vpop.permute.xlu0 %1829
      %1831 = vrot.lane.b32.xlu0 %v1757, 4
      %v1832 = vpop.permute.xlu0 %1831
      %1833 = vrot.lane.b32.xlu0 %v1758, 4
      %v1834 = vpop.permute.xlu0 %1833
      %1835 = vrot.lane.b32.xlu0 %v1759, 4
      %v1836 = vpop.permute.xlu0 %1835
      %1837 = vrot.lane.b32.xlu0 %v1760, 4
      %v1838 = vpop.permute.xlu0 %1837
      %1839 = vrot.lane.b32.xlu0 %v1761, 4
      %v1840 = vpop.permute.xlu0 %1839
      %1841 = vrot.lane.b32.xlu0 %v1762, 4
      %v1842 = vpop.permute.xlu0 %1841
      %1843 = vrot.lane.b32.xlu0 %v1763, 4
      %v1844 = vpop.permute.xlu0 %1843
      %1845 = vrot.lane.b32.xlu0 %v1764, 4
      %v1846 = vpop.permute.xlu0 %1845
      %1847 = vrot.lane.b32.xlu0 %v1765, 4
      %v1848 = vpop.permute.xlu0 %1847
      %1849 = vrot.lane.b32.xlu0 %v1766, 4
      %v1850 = vpop.permute.xlu0 %1849
      %1851 = vrot.lane.b32.xlu0 %v1767, 4
      %v1852 = vpop.permute.xlu0 %1851
      %1853 = vrot.lane.b32.xlu0 %v1768, 4
      %v1854 = vpop.permute.xlu0 %1853
      %1855 = vrot.lane.b32.xlu0 %v1769, 4
      %v1856 = vpop.permute.xlu0 %1855
      %1857 = vrot.lane.b32.xlu0 %v1770, 4
      %v1858 = vpop.permute.xlu0 %1857
      %1859 = vrot.lane.b32.xlu0 %v1771, 4
      %v1860 = vpop.permute.xlu0 %1859
      %1861 = vrot.lane.b32.xlu0 %v1772, 4
      %v1862 = vpop.permute.xlu0 %1861
      %1863 = vrot.lane.b32.xlu0 %v1773, 4
      %v1864 = vpop.permute.xlu0 %1863
      %1865 = vrot.lane.b32.xlu0 %v1774, 4
      %v1866 = vpop.permute.xlu0 %1865
      %1867 = vrot.lane.b32.xlu0 %v1775, 4
      %v1868 = vpop.permute.xlu0 %1867
      %1869 = vrot.lane.b32.xlu0 %v1776, 4
      %v1870 = vpop.permute.xlu0 %1869
      %1871 = vrot.lane.b32.xlu0 %v1777, 4
      %v1872 = vpop.permute.xlu0 %1871
      %1873 = vrot.lane.b32.xlu0 %v1778, 4
      %v1874 = vpop.permute.xlu0 %1873
      %vm1907 = vcmask 31744
      %v1908 = vsel %vm1907, %v1587, %v1812
      %v1909 = vsel %vm1907, %v1588, %v1814
      %v1910 = vsel %vm1907, %v1589, %v1816
      %v1911 = vsel %vm1907, %v1590, %v1818
      %v1912 = vsel %vm1907, %v1591, %v1820
      %v1913 = vsel %vm1907, %v1592, %v1822
      %v1914 = vsel %vm1907, %v1593, %v1824
      %v1915 = vsel %vm1907, %v1594, %v1826
      %v1916 = vsel %vm1907, %v1595, %v1828
      %v1917 = vsel %vm1907, %v1596, %v1830
      %v1918 = vsel %vm1907, %v1597, %v1832
      %v1919 = vsel %vm1907, %v1598, %v1834
      %v1920 = vsel %vm1907, %v1599, %v1836
      %v1921 = vsel %vm1907, %v1600, %v1838
      %v1922 = vsel %vm1907, %v1601, %v1840
      %v1923 = vsel %vm1907, %v1602, %v1842
      %v1924 = vsel %vm1907, %v1603, %v1844
      %v1925 = vsel %vm1907, %v1604, %v1846
      %v1926 = vsel %vm1907, %v1605, %v1848
      %v1927 = vsel %vm1907, %v1606, %v1850
      %v1928 = vsel %vm1907, %v1607, %v1852
      %v1929 = vsel %vm1907, %v1608, %v1854
      %v1930 = vsel %vm1907, %v1609, %v1856
      %v1931 = vsel %vm1907, %v1610, %v1858
      %v1932 = vsel %vm1907, %v1611, %v1860
      %v1933 = vsel %vm1907, %v1612, %v1862
      %v1934 = vsel %vm1907, %v1613, %v1864
      %v1935 = vsel %vm1907, %v1614, %v1866
      %v1936 = vsel %vm1907, %v1615, %v1868
      %v1937 = vsel %vm1907, %v1616, %v1870
      %v1938 = vsel %vm1907, %v1617, %v1872
      %v1939 = vsel %vm1907, %v1618, %v1874
      %vm1940 = vcmask 64512
      %1941 = vst.msk [vmem:[%s210] sm:$0xff] %vm1940, %v1908
      %1942 = vst.msk [vmem:[%s210 + $0x8] sm:$0xff] %vm1940, %v1909
      %1943 = vst.msk [vmem:[%s210 + $0x20] sm:$0xff] %vm1940, %v1910
      %1944 = vst.msk [vmem:[%s210 + $0x28] sm:$0xff] %vm1940, %v1911
      %1945 = vst.msk [vmem:[%s210 + $0x40] sm:$0xff] %vm1940, %v1912
      %1946 = vst.msk [vmem:[%s210 + $0x48] sm:$0xff] %vm1940, %v1913
      %1947 = vst.msk [vmem:[%s210 + $0x60] sm:$0xff] %vm1940, %v1914
      %1948 = vst.msk [vmem:[%s210 + $0x68] sm:$0xff] %vm1940, %v1915
      %1949 = vst.msk [vmem:[%s210 + $0x80] sm:$0xff] %vm1940, %v1916
      %1950 = vst.msk [vmem:[%s210 + $0x88] sm:$0xff] %vm1940, %v1917
      %1951 = vst.msk [vmem:[%s210 + $0xa0] sm:$0xff] %vm1940, %v1918
      %1952 = vst.msk [vmem:[%s210 + $0xa8] sm:$0xff] %vm1940, %v1919
      %1953 = vst.msk [vmem:[%s210 + $0xc0] sm:$0xff] %vm1940, %v1920
      %1954 = vst.msk [vmem:[%s210 + $0xc8] sm:$0xff] %vm1940, %v1921
      %1955 = vst.msk [vmem:[%s210 + $0xe0] sm:$0xff] %vm1940, %v1922
      %1956 = vst.msk [vmem:[%s210 + $0xe8] sm:$0xff] %vm1940, %v1923
      %1957 = vst.msk [vmem:[%s210 + $0x100] sm:$0xff] %vm1940, %v1924
      %1958 = vst.msk [vmem:[%s210 + $0x108] sm:$0xff] %vm1940, %v1925
      %1959 = vst.msk [vmem:[%s210 + $0x120] sm:$0xff] %vm1940, %v1926
      %1960 = vst.msk [vmem:[%s210 + $0x128] sm:$0xff] %vm1940, %v1927
      %1961 = vst.msk [vmem:[%s210 + $0x140] sm:$0xff] %vm1940, %v1928
      %1962 = vst.msk [vmem:[%s210 + $0x148] sm:$0xff] %vm1940, %v1929
      %1963 = vst.msk [vmem:[%s210 + $0x160] sm:$0xff] %vm1940, %v1930
      %1964 = vst.msk [vmem:[%s210 + $0x168] sm:$0xff] %vm1940, %v1931
      %1965 = vst.msk [vmem:[%s210 + $0x180] sm:$0xff] %vm1940, %v1932
      %1966 = vst.msk [vmem:[%s210 + $0x188] sm:$0xff] %vm1940, %v1933
      %1967 = vst.msk [vmem:[%s210 + $0x1a0] sm:$0xff] %vm1940, %v1934
      %1968 = vst.msk [vmem:[%s210 + $0x1a8] sm:$0xff] %vm1940, %v1935
      %1969 = vst.msk [vmem:[%s210 + $0x1c0] sm:$0xff] %vm1940, %v1936
      %1970 = vst.msk [vmem:[%s210 + $0x1c8] sm:$0xff] %vm1940, %v1937
      %1971 = vst.msk [vmem:[%s210 + $0x1e0] sm:$0xff] %vm1940, %v1938
      %1972 = vst.msk [vmem:[%s210 + $0x1e8] sm:$0xff] %vm1940, %v1939
      %v1973 = vlaneseq
      %v1974 = vshrl.u32 %v1973, 7
      %v1975 = vsub.s32 0, %v1974
      %v1976 = vrot.slane %v266, %v1975
      %v1977 = vmul.f32 %v823, %v1976
      %v1978 = vmul.f32 %v824, %v1976
      %v1979 = vmul.f32 %v825, %v1976
      %v1980 = vmul.f32 %v826, %v1976
      %v1981 = vmul.f32 %v827, %v1976
      %v1982 = vmul.f32 %v828, %v1976
      %v1983 = vmul.f32 %v829, %v1976
      %v1984 = vmul.f32 %v830, %v1976
      %v1985 = vmul.f32 %v831, %v1976
      %v1986 = vmul.f32 %v832, %v1976
      %v1987 = vmul.f32 %v833, %v1976
      %v1988 = vmul.f32 %v834, %v1976
      %v1989 = vmul.f32 %v835, %v1976
      %v1990 = vmul.f32 %v836, %v1976
      %v1991 = vmul.f32 %v837, %v1976
      %v1992 = vmul.f32 %v838, %v1976
      %v1993 = vmul.f32 %v839, %v1976
      %v1994 = vmul.f32 %v840, %v1976
      %v1995 = vmul.f32 %v841, %v1976
      %v1996 = vmul.f32 %v842, %v1976
      %v1997 = vmul.f32 %v843, %v1976
      %v1998 = vmul.f32 %v844, %v1976
      %v1999 = vmul.f32 %v845, %v1976
      %v2000 = vmul.f32 %v846, %v1976
      %v2001 = vmul.f32 %v847, %v1976
      %v2002 = vmul.f32 %v848, %v1976
      %v2003 = vmul.f32 %v849, %v1976
      %v2004 = vmul.f32 %v850, %v1976
      %v2005 = vmul.f32 %v851, %v1976
      %v2006 = vmul.f32 %v852, %v1976
      %v2007 = vmul.f32 %v853, %v1976
      %v2008 = vmul.f32 %v854, %v1976
      %v2009 = vlaneseq
      %v2010 = vshrl.u32 %v2009, 7
      %v2011 = vsub.s32 1, %v2010
      %v2012 = vrot.slane %v266, %v2011
      %v2013 = vmul.f32 %v825, %v2012
      %v2014 = vmul.f32 %v826, %v2012
      %v2015 = vmul.f32 %v827, %v2012
      %v2016 = vmul.f32 %v828, %v2012
      %v2017 = vmul.f32 %v829, %v2012
      %v2018 = vmul.f32 %v830, %v2012
      %v2019 = vmul.f32 %v831, %v2012
      %v2020 = vmul.f32 %v832, %v2012
      %v2021 = vmul.f32 %v833, %v2012
      %v2022 = vmul.f32 %v834, %v2012
      %v2023 = vmul.f32 %v835, %v2012
      %v2024 = vmul.f32 %v836, %v2012
      %v2025 = vmul.f32 %v837, %v2012
      %v2026 = vmul.f32 %v838, %v2012
      %v2027 = vmul.f32 %v839, %v2012
      %v2028 = vmul.f32 %v840, %v2012
      %v2029 = vmul.f32 %v841, %v2012
      %v2030 = vmul.f32 %v842, %v2012
      %v2031 = vmul.f32 %v843, %v2012
      %v2032 = vmul.f32 %v844, %v2012
      %v2033 = vmul.f32 %v845, %v2012
      %v2034 = vmul.f32 %v846, %v2012
      %v2035 = vmul.f32 %v847, %v2012
      %v2036 = vmul.f32 %v848, %v2012
      %v2037 = vmul.f32 %v849, %v2012
      %v2038 = vmul.f32 %v850, %v2012
      %v2039 = vmul.f32 %v851, %v2012
      %v2040 = vmul.f32 %v852, %v2012
      %v2041 = vmul.f32 %v853, %v2012
      %v2042 = vmul.f32 %v854, %v2012
      %v2043 = vmul.f32 %v855, %v2012
      %v2044 = vmul.f32 %v856, %v2012
      %v2045 = vadd.f32 %v1977, %v2013
      %v2046 = vadd.f32 %v1978, %v2014
      %v2047 = vadd.f32 %v1979, %v2015
      %v2048 = vadd.f32 %v1980, %v2016
      %v2049 = vadd.f32 %v1981, %v2017
      %v2050 = vadd.f32 %v1982, %v2018
      %v2051 = vadd.f32 %v1983, %v2019
      %v2052 = vadd.f32 %v1984, %v2020
      %v2053 = vadd.f32 %v1985, %v2021
      %v2054 = vadd.f32 %v1986, %v2022
      %v2055 = vadd.f32 %v1987, %v2023
      %v2056 = vadd.f32 %v1988, %v2024
      %v2057 = vadd.f32 %v1989, %v2025
      %v2058 = vadd.f32 %v1990, %v2026
      %v2059 = vadd.f32 %v1991, %v2027
      %v2060 = vadd.f32 %v1992, %v2028
      %v2061 = vadd.f32 %v1993, %v2029
      %v2062 = vadd.f32 %v1994, %v2030
      %v2063 = vadd.f32 %v1995, %v2031
      %v2064 = vadd.f32 %v1996, %v2032
      %v2065 = vadd.f32 %v1997, %v2033
      %v2066 = vadd.f32 %v1998, %v2034
      %v2067 = vadd.f32 %v1999, %v2035
      %v2068 = vadd.f32 %v2000, %v2036
      %v2069 = vadd.f32 %v2001, %v2037
      %v2070 = vadd.f32 %v2002, %v2038
      %v2071 = vadd.f32 %v2003, %v2039
      %v2072 = vadd.f32 %v2004, %v2040
      %v2073 = vadd.f32 %v2005, %v2041
      %v2074 = vadd.f32 %v2006, %v2042
      %v2075 = vadd.f32 %v2007, %v2043
      %v2076 = vadd.f32 %v2008, %v2044
      %v2077 = vlaneseq
      %v2078 = vshrl.u32 %v2077, 7
      %v2079 = vsub.s32 2, %v2078
      %v2080 = vrot.slane %v266, %v2079
      %v2081 = vmul.f32 %v827, %v2080
      %v2082 = vmul.f32 %v828, %v2080
      %v2083 = vmul.f32 %v829, %v2080
      %v2084 = vmul.f32 %v830, %v2080
      %v2085 = vmul.f32 %v831, %v2080
      %v2086 = vmul.f32 %v832, %v2080
      %v2087 = vmul.f32 %v833, %v2080
      %v2088 = vmul.f32 %v834, %v2080
      %v2089 = vmul.f32 %v835, %v2080
      %v2090 = vmul.f32 %v836, %v2080
      %v2091 = vmul.f32 %v837, %v2080
      %v2092 = vmul.f32 %v838, %v2080
      %v2093 = vmul.f32 %v839, %v2080
      %v2094 = vmul.f32 %v840, %v2080
      %v2095 = vmul.f32 %v841, %v2080
      %v2096 = vmul.f32 %v842, %v2080
      %v2097 = vmul.f32 %v843, %v2080
      %v2098 = vmul.f32 %v844, %v2080
      %v2099 = vmul.f32 %v845, %v2080
      %v2100 = vmul.f32 %v846, %v2080
      %v2101 = vmul.f32 %v847, %v2080
      %v2102 = vmul.f32 %v848, %v2080
      %v2103 = vmul.f32 %v849, %v2080
      %v2104 = vmul.f32 %v850, %v2080
      %v2105 = vmul.f32 %v851, %v2080
      %v2106 = vmul.f32 %v852, %v2080
      %v2107 = vmul.f32 %v853, %v2080
      %v2108 = vmul.f32 %v854, %v2080
      %v2109 = vmul.f32 %v855, %v2080
      %v2110 = vmul.f32 %v856, %v2080
      %v2111 = vmul.f32 %v857, %v2080
      %v2112 = vmul.f32 %v858, %v2080
      %v2113 = vadd.f32 %v2045, %v2081
      %v2114 = vadd.f32 %v2046, %v2082
      %v2115 = vadd.f32 %v2047, %v2083
      %v2116 = vadd.f32 %v2048, %v2084
      %v2117 = vadd.f32 %v2049, %v2085
      %v2118 = vadd.f32 %v2050, %v2086
      %v2119 = vadd.f32 %v2051, %v2087
      %v2120 = vadd.f32 %v2052, %v2088
      %v2121 = vadd.f32 %v2053, %v2089
      %v2122 = vadd.f32 %v2054, %v2090
      %v2123 = vadd.f32 %v2055, %v2091
      %v2124 = vadd.f32 %v2056, %v2092
      %v2125 = vadd.f32 %v2057, %v2093
      %v2126 = vadd.f32 %v2058, %v2094
      %v2127 = vadd.f32 %v2059, %v2095
      %v2128 = vadd.f32 %v2060, %v2096
      %v2129 = vadd.f32 %v2061, %v2097
      %v2130 = vadd.f32 %v2062, %v2098
      %v2131 = vadd.f32 %v2063, %v2099
      %v2132 = vadd.f32 %v2064, %v2100
      %v2133 = vadd.f32 %v2065, %v2101
      %v2134 = vadd.f32 %v2066, %v2102
      %v2135 = vadd.f32 %v2067, %v2103
      %v2136 = vadd.f32 %v2068, %v2104
      %v2137 = vadd.f32 %v2069, %v2105
      %v2138 = vadd.f32 %v2070, %v2106
      %v2139 = vadd.f32 %v2071, %v2107
      %v2140 = vadd.f32 %v2072, %v2108
      %v2141 = vadd.f32 %v2073, %v2109
      %v2142 = vadd.f32 %v2074, %v2110
      %v2143 = vadd.f32 %v2075, %v2111
      %v2144 = vadd.f32 %v2076, %v2112
      %v2145 = vmul.f32 %v1411, %v1976
      %v2146 = vmul.f32 %v1412, %v1976
      %v2147 = vmul.f32 %v1413, %v1976
      %v2148 = vmul.f32 %v1414, %v1976
      %v2149 = vmul.f32 %v1415, %v1976
      %v2150 = vmul.f32 %v1416, %v1976
      %v2151 = vmul.f32 %v1417, %v1976
      %v2152 = vmul.f32 %v1418, %v1976
      %v2153 = vmul.f32 %v1419, %v1976
      %v2154 = vmul.f32 %v1420, %v1976
      %v2155 = vmul.f32 %v1421, %v1976
      %v2156 = vmul.f32 %v1422, %v1976
      %v2157 = vmul.f32 %v1423, %v1976
      %v2158 = vmul.f32 %v1424, %v1976
      %v2159 = vmul.f32 %v1425, %v1976
      %v2160 = vmul.f32 %v1426, %v1976
      %v2161 = vmul.f32 %v1427, %v1976
      %v2162 = vmul.f32 %v1428, %v1976
      %v2163 = vmul.f32 %v1429, %v1976
      %v2164 = vmul.f32 %v1430, %v1976
      %v2165 = vmul.f32 %v1431, %v1976
      %v2166 = vmul.f32 %v1432, %v1976
      %v2167 = vmul.f32 %v1433, %v1976
      %v2168 = vmul.f32 %v1434, %v1976
      %v2169 = vmul.f32 %v1435, %v1976
      %v2170 = vmul.f32 %v1436, %v1976
      %v2171 = vmul.f32 %v1437, %v1976
      %v2172 = vmul.f32 %v1438, %v1976
      %v2173 = vmul.f32 %v1439, %v1976
      %v2174 = vmul.f32 %v1440, %v1976
      %v2175 = vmul.f32 %v1441, %v1976
      %v2176 = vmul.f32 %v1442, %v1976
      %v2177 = vmul.f32 %v1413, %v2012
      %v2178 = vmul.f32 %v1414, %v2012
      %v2179 = vmul.f32 %v1415, %v2012
      %v2180 = vmul.f32 %v1416, %v2012
      %v2181 = vmul.f32 %v1417, %v2012
      %v2182 = vmul.f32 %v1418, %v2012
      %v2183 = vmul.f32 %v1419, %v2012
      %v2184 = vmul.f32 %v1420, %v2012
      %v2185 = vmul.f32 %v1421, %v2012
      %v2186 = vmul.f32 %v1422, %v2012
      %v2187 = vmul.f32 %v1423, %v2012
      %v2188 = vmul.f32 %v1424, %v2012
      %v2189 = vmul.f32 %v1425, %v2012
      %v2190 = vmul.f32 %v1426, %v2012
      %v2191 = vmul.f32 %v1427, %v2012
      %v2192 = vmul.f32 %v1428, %v2012
      %v2193 = vmul.f32 %v1429, %v2012
      %v2194 = vmul.f32 %v1430, %v2012
      %v2195 = vmul.f32 %v1431, %v2012
      %v2196 = vmul.f32 %v1432, %v2012
      %v2197 = vmul.f32 %v1433, %v2012
      %v2198 = vmul.f32 %v1434, %v2012
      %v2199 = vmul.f32 %v1435, %v2012
      %v2200 = vmul.f32 %v1436, %v2012
      %v2201 = vmul.f32 %v1437, %v2012
      %v2202 = vmul.f32 %v1438, %v2012
      %v2203 = vmul.f32 %v1439, %v2012
      %v2204 = vmul.f32 %v1440, %v2012
      %v2205 = vmul.f32 %v1441, %v2012
      %v2206 = vmul.f32 %v1442, %v2012
      %v2207 = vmul.f32 %v1443, %v2012
      %v2208 = vmul.f32 %v1444, %v2012
      %v2209 = vadd.f32 %v2145, %v2177
      %v2210 = vadd.f32 %v2146, %v2178
      %v2211 = vadd.f32 %v2147, %v2179
      %v2212 = vadd.f32 %v2148, %v2180
      %v2213 = vadd.f32 %v2149, %v2181
      %v2214 = vadd.f32 %v2150, %v2182
      %v2215 = vadd.f32 %v2151, %v2183
      %v2216 = vadd.f32 %v2152, %v2184
      %v2217 = vadd.f32 %v2153, %v2185
      %v2218 = vadd.f32 %v2154, %v2186
      %v2219 = vadd.f32 %v2155, %v2187
      %v2220 = vadd.f32 %v2156, %v2188
      %v2221 = vadd.f32 %v2157, %v2189
      %v2222 = vadd.f32 %v2158, %v2190
      %v2223 = vadd.f32 %v2159, %v2191
      %v2224 = vadd.f32 %v2160, %v2192
      %v2225 = vadd.f32 %v2161, %v2193
      %v2226 = vadd.f32 %v2162, %v2194
      %v2227 = vadd.f32 %v2163, %v2195
      %v2228 = vadd.f32 %v2164, %v2196
      %v2229 = vadd.f32 %v2165, %v2197
      %v2230 = vadd.f32 %v2166, %v2198
      %v2231 = vadd.f32 %v2167, %v2199
      %v2232 = vadd.f32 %v2168, %v2200
      %v2233 = vadd.f32 %v2169, %v2201
      %v2234 = vadd.f32 %v2170, %v2202
      %v2235 = vadd.f32 %v2171, %v2203
      %v2236 = vadd.f32 %v2172, %v2204
      %v2237 = vadd.f32 %v2173, %v2205
      %v2238 = vadd.f32 %v2174, %v2206
      %v2239 = vadd.f32 %v2175, %v2207
      %v2240 = vadd.f32 %v2176, %v2208
      %v2241 = vmul.f32 %v1415, %v2080
      %v2242 = vmul.f32 %v1416, %v2080
      %v2243 = vmul.f32 %v1417, %v2080
      %v2244 = vmul.f32 %v1418, %v2080
      %v2245 = vmul.f32 %v1419, %v2080
      %v2246 = vmul.f32 %v1420, %v2080
      %v2247 = vmul.f32 %v1421, %v2080
      %v2248 = vmul.f32 %v1422, %v2080
      %v2249 = vmul.f32 %v1423, %v2080
      %v2250 = vmul.f32 %v1424, %v2080
      %v2251 = vmul.f32 %v1425, %v2080
      %v2252 = vmul.f32 %v1426, %v2080
      %v2253 = vmul.f32 %v1427, %v2080
      %v2254 = vmul.f32 %v1428, %v2080
      %v2255 = vmul.f32 %v1429, %v2080
      %v2256 = vmul.f32 %v1430, %v2080
      %v2257 = vmul.f32 %v1431, %v2080
      %v2258 = vmul.f32 %v1432, %v2080
      %v2259 = vmul.f32 %v1433, %v2080
      %v2260 = vmul.f32 %v1434, %v2080
      %v2261 = vmul.f32 %v1435, %v2080
      %v2262 = vmul.f32 %v1436, %v2080
      %v2263 = vmul.f32 %v1437, %v2080
      %v2264 = vmul.f32 %v1438, %v2080
      %v2265 = vmul.f32 %v1439, %v2080
      %v2266 = vmul.f32 %v1440, %v2080
      %v2267 = vmul.f32 %v1441, %v2080
      %v2268 = vmul.f32 %v1442, %v2080
      %v2269 = vmul.f32 %v1443, %v2080
      %v2270 = vmul.f32 %v1444, %v2080
      %v2271 = vmul.f32 %v1445, %v2080
      %v2272 = vmul.f32 %v1446, %v2080
      %v2273 = vadd.f32 %v2209, %v2241
      %v2274 = vadd.f32 %v2210, %v2242
      %v2275 = vadd.f32 %v2211, %v2243
      %v2276 = vadd.f32 %v2212, %v2244
      %v2277 = vadd.f32 %v2213, %v2245
      %v2278 = vadd.f32 %v2214, %v2246
      %v2279 = vadd.f32 %v2215, %v2247
      %v2280 = vadd.f32 %v2216, %v2248
      %v2281 = vadd.f32 %v2217, %v2249
      %v2282 = vadd.f32 %v2218, %v2250
      %v2283 = vadd.f32 %v2219, %v2251
      %v2284 = vadd.f32 %v2220, %v2252
      %v2285 = vadd.f32 %v2221, %v2253
      %v2286 = vadd.f32 %v2222, %v2254
      %v2287 = vadd.f32 %v2223, %v2255
      %v2288 = vadd.f32 %v2224, %v2256
      %v2289 = vadd.f32 %v2225, %v2257
      %v2290 = vadd.f32 %v2226, %v2258
      %v2291 = vadd.f32 %v2227, %v2259
      %v2292 = vadd.f32 %v2228, %v2260
      %v2293 = vadd.f32 %v2229, %v2261
      %v2294 = vadd.f32 %v2230, %v2262
      %v2295 = vadd.f32 %v2231, %v2263
      %v2296 = vadd.f32 %v2232, %v2264
      %v2297 = vadd.f32 %v2233, %v2265
      %v2298 = vadd.f32 %v2234, %v2266
      %v2299 = vadd.f32 %v2235, %v2267
      %v2300 = vadd.f32 %v2236, %v2268
      %v2301 = vadd.f32 %v2237, %v2269
      %v2302 = vadd.f32 %v2238, %v2270
      %v2303 = vadd.f32 %v2239, %v2271
      %v2304 = vadd.f32 %v2240, %v2272
      %2337 = vrot.lane.b32.xlu0 %v2273, 4
      %v2338 = vpop.permute.xlu0 %2337
      %2339 = vrot.lane.b32.xlu0 %v2274, 4
      %v2340 = vpop.permute.xlu0 %2339
      %2341 = vrot.lane.b32.xlu0 %v2275, 4
      %v2342 = vpop.permute.xlu0 %2341
      %2343 = vrot.lane.b32.xlu0 %v2276, 4
      %v2344 = vpop.permute.xlu0 %2343
      %2345 = vrot.lane.b32.xlu0 %v2277, 4
      %v2346 = vpop.permute.xlu0 %2345
      %2347 = vrot.lane.b32.xlu0 %v2278, 4
      %v2348 = vpop.permute.xlu0 %2347
      %2349 = vrot.lane.b32.xlu0 %v2279, 4
      %v2350 = vpop.permute.xlu0 %2349
      %2351 = vrot.lane.b32.xlu0 %v2280, 4
      %v2352 = vpop.permute.xlu0 %2351
      %2353 = vrot.lane.b32.xlu0 %v2281, 4
      %v2354 = vpop.permute.xlu0 %2353
      %2355 = vrot.lane.b32.xlu0 %v2282, 4
      %v2356 = vpop.permute.xlu0 %2355
      %2357 = vrot.lane.b32.xlu0 %v2283, 4
      %v2358 = vpop.permute.xlu0 %2357
      %2359 = vrot.lane.b32.xlu0 %v2284, 4
      %v2360 = vpop.permute.xlu0 %2359
      %2361 = vrot.lane.b32.xlu0 %v2285, 4
      %v2362 = vpop.permute.xlu0 %2361
      %2363 = vrot.lane.b32.xlu0 %v2286, 4
      %v2364 = vpop.permute.xlu0 %2363
      %2365 = vrot.lane.b32.xlu0 %v2287, 4
      %v2366 = vpop.permute.xlu0 %2365
      %2367 = vrot.lane.b32.xlu0 %v2288, 4
      %v2368 = vpop.permute.xlu0 %2367
      %2369 = vrot.lane.b32.xlu0 %v2289, 4
      %v2370 = vpop.permute.xlu0 %2369
      %2371 = vrot.lane.b32.xlu0 %v2290, 4
      %v2372 = vpop.permute.xlu0 %2371
      %2373 = vrot.lane.b32.xlu0 %v2291, 4
      %v2374 = vpop.permute.xlu0 %2373
      %2375 = vrot.lane.b32.xlu0 %v2292, 4
      %v2376 = vpop.permute.xlu0 %2375
      %2377 = vrot.lane.b32.xlu0 %v2293, 4
      %v2378 = vpop.permute.xlu0 %2377
      %2379 = vrot.lane.b32.xlu0 %v2294, 4
      %v2380 = vpop.permute.xlu0 %2379
      %2381 = vrot.lane.b32.xlu0 %v2295, 4
      %v2382 = vpop.permute.xlu0 %2381
      %2383 = vrot.lane.b32.xlu0 %v2296, 4
      %v2384 = vpop.permute.xlu0 %2383
      %2385 = vrot.lane.b32.xlu0 %v2297, 4
      %v2386 = vpop.permute.xlu0 %2385
      %2387 = vrot.lane.b32.xlu0 %v2298, 4
      %v2388 = vpop.permute.xlu0 %2387
      %2389 = vrot.lane.b32.xlu0 %v2299, 4
      %v2390 = vpop.permute.xlu0 %2389
      %2391 = vrot.lane.b32.xlu0 %v2300, 4
      %v2392 = vpop.permute.xlu0 %2391
      %2393 = vrot.lane.b32.xlu0 %v2301, 4
      %v2394 = vpop.permute.xlu0 %2393
      %2395 = vrot.lane.b32.xlu0 %v2302, 4
      %v2396 = vpop.permute.xlu0 %2395
      %2397 = vrot.lane.b32.xlu0 %v2303, 4
      %v2398 = vpop.permute.xlu0 %2397
      %2399 = vrot.lane.b32.xlu0 %v2304, 4
      %v2400 = vpop.permute.xlu0 %2399
      %v2433 = vsel %vm1907, %v2113, %v2338
      %v2434 = vsel %vm1907, %v2114, %v2340
      %v2435 = vsel %vm1907, %v2115, %v2342
      %v2436 = vsel %vm1907, %v2116, %v2344
      %v2437 = vsel %vm1907, %v2117, %v2346
      %v2438 = vsel %vm1907, %v2118, %v2348
      %v2439 = vsel %vm1907, %v2119, %v2350
      %v2440 = vsel %vm1907, %v2120, %v2352
      %v2441 = vsel %vm1907, %v2121, %v2354
      %v2442 = vsel %vm1907, %v2122, %v2356
      %v2443 = vsel %vm1907, %v2123, %v2358
      %v2444 = vsel %vm1907, %v2124, %v2360
      %v2445 = vsel %vm1907, %v2125, %v2362
      %v2446 = vsel %vm1907, %v2126, %v2364
      %v2447 = vsel %vm1907, %v2127, %v2366
      %v2448 = vsel %vm1907, %v2128, %v2368
      %v2449 = vsel %vm1907, %v2129, %v2370
      %v2450 = vsel %vm1907, %v2130, %v2372
      %v2451 = vsel %vm1907, %v2131, %v2374
      %v2452 = vsel %vm1907, %v2132, %v2376
      %v2453 = vsel %vm1907, %v2133, %v2378
      %v2454 = vsel %vm1907, %v2134, %v2380
      %v2455 = vsel %vm1907, %v2135, %v2382
      %v2456 = vsel %vm1907, %v2136, %v2384
      %v2457 = vsel %vm1907, %v2137, %v2386
      %v2458 = vsel %vm1907, %v2138, %v2388
      %v2459 = vsel %vm1907, %v2139, %v2390
      %v2460 = vsel %vm1907, %v2140, %v2392
      %v2461 = vsel %vm1907, %v2141, %v2394
      %v2462 = vsel %vm1907, %v2142, %v2396
      %v2463 = vsel %vm1907, %v2143, %v2398
      %v2464 = vsel %vm1907, %v2144, %v2400
      %s2465 = scalar_lea.vmem %s210, 16
      %2466 = vst.msk [vmem:[%s2465] sm:$0xff] %vm1940, %v2433
      %2467 = vst.msk [vmem:[%s2465 + $0x8] sm:$0xff] %vm1940, %v2434
      %2468 = vst.msk [vmem:[%s2465 + $0x20] sm:$0xff] %vm1940, %v2435
      %2469 = vst.msk [vmem:[%s2465 + $0x28] sm:$0xff] %vm1940, %v2436
      %2470 = vst.msk [vmem:[%s2465 + $0x40] sm:$0xff] %vm1940, %v2437
      %2471 = vst.msk [vmem:[%s2465 + $0x48] sm:$0xff] %vm1940, %v2438
      %2472 = vst.msk [vmem:[%s2465 + $0x60] sm:$0xff] %vm1940, %v2439
      %2473 = vst.msk [vmem:[%s2465 + $0x68] sm:$0xff] %vm1940, %v2440
      %2474 = vst.msk [vmem:[%s2465 + $0x80] sm:$0xff] %vm1940, %v2441
      %2475 = vst.msk [vmem:[%s2465 + $0x88] sm:$0xff] %vm1940, %v2442
      %2476 = vst.msk [vmem:[%s2465 + $0xa0] sm:$0xff] %vm1940, %v2443
      %2477 = vst.msk [vmem:[%s2465 + $0xa8] sm:$0xff] %vm1940, %v2444
      %2478 = vst.msk [vmem:[%s2465 + $0xc0] sm:$0xff] %vm1940, %v2445
      %2479 = vst.msk [vmem:[%s2465 + $0xc8] sm:$0xff] %vm1940, %v2446
      %2480 = vst.msk [vmem:[%s2465 + $0xe0] sm:$0xff] %vm1940, %v2447
      %2481 = vst.msk [vmem:[%s2465 + $0xe8] sm:$0xff] %vm1940, %v2448
      %2482 = vst.msk [vmem:[%s2465 + $0x100] sm:$0xff] %vm1940, %v2449
      %2483 = vst.msk [vmem:[%s2465 + $0x108] sm:$0xff] %vm1940, %v2450
      %2484 = vst.msk [vmem:[%s2465 + $0x120] sm:$0xff] %vm1940, %v2451
      %2485 = vst.msk [vmem:[%s2465 + $0x128] sm:$0xff] %vm1940, %v2452
      %2486 = vst.msk [vmem:[%s2465 + $0x140] sm:$0xff] %vm1940, %v2453
      %2487 = vst.msk [vmem:[%s2465 + $0x148] sm:$0xff] %vm1940, %v2454
      %2488 = vst.msk [vmem:[%s2465 + $0x160] sm:$0xff] %vm1940, %v2455
      %2489 = vst.msk [vmem:[%s2465 + $0x168] sm:$0xff] %vm1940, %v2456
      %2490 = vst.msk [vmem:[%s2465 + $0x180] sm:$0xff] %vm1940, %v2457
      %2491 = vst.msk [vmem:[%s2465 + $0x188] sm:$0xff] %vm1940, %v2458
      %2492 = vst.msk [vmem:[%s2465 + $0x1a0] sm:$0xff] %vm1940, %v2459
      %2493 = vst.msk [vmem:[%s2465 + $0x1a8] sm:$0xff] %vm1940, %v2460
      %2494 = vst.msk [vmem:[%s2465 + $0x1c0] sm:$0xff] %vm1940, %v2461
      %2495 = vst.msk [vmem:[%s2465 + $0x1c8] sm:$0xff] %vm1940, %v2462
      %2496 = vst.msk [vmem:[%s2465 + $0x1e0] sm:$0xff] %vm1940, %v2463
      %2497 = vst.msk [vmem:[%s2465 + $0x1e8] sm:$0xff] %vm1940, %v2464
      %p2498 = scmp.lt.s32.totalorder %s14, 1
      %s2499 = scalar_select %p2498, %s14, 1
      %s2500 = smul.addr %s2499, 64
      %s2501 = smul.addr %s2500, 8
      %s2502 = scalar_lea.vmem %s3, %s2501
      // Predicated region
      $region33: #{_lambda_.1} parent=31 // pred_check
        %p2503 = pneg %p110
      $region34: #{_lambda_.1} parent=31 // pred_check_branch
        %2505 = sbr.rel (%p2503) target = $region36
      $region35: #{_lambda_.1} parent=31 // pred_region
        _
      $region36: #{_lambda_.1} parent=31 // pred_fallthru
        _
    $region32: #{_lambda_.1} parent=5 // pred_fallthru
      _
    %p2506 = scmp.le.s32.totalorder 2, %s9
    // Predicated region
    $region37: #{_lambda_.1} parent=5 // pred_check
      %p2507 = pneg %p2506
    $region38: #{_lambda_.1} parent=5 // pred_check_branch
      %2509 = sbr.rel (%p2507) target = $region40
    $region39: #{_lambda_.1} parent=5 // pred_region
      %s2510 = ssub.s32 %s9, 2
      // Predicated region
      $region41: #{_lambda_.1} parent=39 // pred_check
        %p2511 = pneg %p116
      $region42: #{_lambda_.1} parent=39 // pred_check_branch
        %2513 = sbr.rel (%p2511) target = $region44
      $region43: #{_lambda_.1} parent=39 // pred_region
        %p2514 = scmp.lt.s32.totalorder %s15, 1
        %s2515 = scalar_select %p2514, %s15, 1
        %s2516 = smul.addr %s2515, 64
        %s2517 = smul.addr %s2516, 8
        %s2518 = scalar_lea.vmem %s3, %s2517
      $region44: #{_lambda_.1} parent=39 // pred_fallthru
        _
    $region40: #{_lambda_.1} parent=5 // pred_fallthru
      _
  $region6: #{_lambda_.1} parent=0 // loop_footer
    %s13 = sadd.s32 1, %s9
  $region7: #{_lambda_.1} parent=0 // loop_footer_branch
    %8 = sbr.rel target = $region3
  $region8: #{_lambda_.1} parent=0 // loop_exit
    _

</llo_original>
